<compile_context>
chip_gen: v6e
topology: v6e:2x2x1
jax: 0.10.0
libtpu: 0.0.40
codegen_flags: <defaults>
</compile_context>

<pallas_src>
import functools

import jax
import jax.numpy as jnp
from jax.experimental import pallas as pl
from jax.experimental.pallas import tpu as pltpu


def _round_up(x, m):
    return (x + m - 1) // m * m


def _nested_block_kernel(x_ref, w1_ref, b1_ref, w2_ref, b2_ref, m_ref, o_ref,
                         buf1, patch1, buf2, patch2, *,
                         H, W, Cin, Cmid, Cp1, Cp2, P, neg_slope):
    """Fused (conv3x3 + folded BN + LeakyReLU) x 2 for one image.

    x_ref  : (1, Cin, H*W)   flattened NCHW input tile
    w1_ref : (Cmid, 9*Cp1)   layer-1 packed weights (BN scale folded in)
    b1_ref : (Cmid, 1)       layer-1 folded bias (conv bias + BN)
    w2_ref : (Cout, 9*Cp2)   layer-2 packed weights
    b2_ref : (Cout, 1)       layer-2 folded bias
    m_ref  : (2, H*W)        column masks: row0 for dw=-1, row1 for dw=+1
    o_ref  : (1, Cout, H*W)
    buf*   : (C, H*W + 2*P)  zero-padded flat spatial buffers (VMEM scratch)
    patch* : (9*Cp, H*W)     im2col patch matrices (VMEM scratch)
    """
    HW = H * W
    taps = [(dh, dw) for dh in (-1, 0, 1) for dw in (-1, 0, 1)]

    mask_l = m_ref[0:1, :]   # zero where w == 0      (used when dw == -1)
    mask_r = m_ref[1:2, :]   # zero where w == W - 1  (used when dw == +1)

    def leaky(v):
        return jnp.maximum(v, neg_slope * v)

    def build_patch(buf, patch, act, c, cpad):
        # Zero the pad regions, drop the activation into the interior of the
        # flat buffer; each conv tap is then a static lane-shifted slice.
        buf[...] = jnp.zeros_like(buf)
        if c != cpad:
            patch[...] = jnp.zeros_like(patch)   # keep pad rows at zero
        buf[:, P:P + HW] = act
        for t, (dh, dw) in enumerate(taps):
            s = dh * W + dw
            piece = buf[:, P + s:P + s + HW]     # (c, HW)
            if dw == -1:
                piece = piece * mask_l
            elif dw == 1:
                piece = piece * mask_r
            patch[t * cpad:t * cpad + c, :] = piece

    # ---- layer 1: Conv3x3(+bias) -> BN(eval, folded) -> LeakyReLU ----
    build_patch(buf1, patch1, x_ref[0], Cin, Cp1)
    h = jnp.dot(w1_ref[...], patch1[...], preferred_element_type=jnp.float32)
    h = leaky(h + b1_ref[...])
    # Dropout(0.2) is identity in eval mode.

    # ---- layer 2: Conv3x3(+bias) -> BN(eval, folded) -> LeakyReLU ----
    build_patch(buf2, patch2, h, Cmid, Cp2)
    o = jnp.dot(w2_ref[...], patch2[...], preferred_element_type=jnp.float32)
    o = leaky(o + b2_ref[...])
    o_ref[0] = o.astype(o_ref.dtype)


def _pack_layer(w, conv_b, gamma, beta, rmean, rvar, eps, cpad):
    """Fold eval BN + conv bias into ((Co, 9*cpad) weights, (Co, 1) bias)."""
    co, ci = w.shape[0], w.shape[1]
    s = gamma / jnp.sqrt(rvar + eps)                       # (Co,)
    w_eff = w * s[:, None, None, None]                     # (Co, Ci, 3, 3)
    bias = (beta + (conv_b - rmean) * s).reshape(co, 1)
    # (Co, Ci, 3, 3) -> (Co, 3, 3, Ci) -> pad Ci -> (Co, 9*cpad), tap-major.
    wt = jnp.transpose(w_eff, (0, 2, 3, 1))
    wt = jnp.pad(wt, ((0, 0), (0, 0), (0, 0), (0, cpad - ci)))
    return wt.reshape(co, 9 * cpad), bias


def nested_block_forward(x_nchw, params, eps=1e-5, negative_slope=0.01):
    """NestedBlock forward (eval mode). Input/output are NCHW like PyTorch."""
    N, Cin, H, W = x_nchw.shape
    Cmid = params["w1"].shape[0]
    Cout = params["w2"].shape[0]
    HW = H * W
    P = 128                               # lane padding of the flat buffers
    Cp1 = _round_up(Cin, 8)
    Cp2 = _round_up(Cmid, 8)

    w1p, b1p = _pack_layer(params["w1"], params["cb1"], params["g1"],
                           params["b1"], params["rm1"], params["rv1"], eps, Cp1)
    w2p, b2p = _pack_layer(params["w2"], params["cb2"], params["g2"],
                           params["b2"], params["rm2"], params["rv2"], eps, Cp2)

    # Column-boundary masks for the shifted flat views (dw = -1 / +1).
    col = jnp.arange(HW, dtype=jnp.int32) % W
    masks = jnp.stack([(col != 0).astype(jnp.float32),
                       (col != W - 1).astype(jnp.float32)], axis=0)  # (2, HW)

    x_flat = x_nchw.reshape(N, Cin, HW)   # free reshape, stays channels-first

    kernel = functools.partial(
        _nested_block_kernel, H=H, W=W, Cin=Cin, Cmid=Cmid,
        Cp1=Cp1, Cp2=Cp2, P=P, neg_slope=negative_slope)

    out_flat = pl.pallas_call(
        kernel,
        out_shape=jax.ShapeDtypeStruct((N, Cout, HW), x_nchw.dtype),
        grid_spec=pltpu.PrefetchScalarGridSpec(
            num_scalar_prefetch=0,
            grid=(N,),
            in_specs=[
                pl.BlockSpec((1, Cin, HW), lambda n: (n, 0, 0)),
                pl.BlockSpec((Cmid, 9 * Cp1), lambda n: (0, 0)),
                pl.BlockSpec((Cmid, 1), lambda n: (0, 0)),
                pl.BlockSpec((Cout, 9 * Cp2), lambda n: (0, 0)),
                pl.BlockSpec((Cout, 1), lambda n: (0, 0)),
                pl.BlockSpec((2, HW), lambda n: (0, 0)),
            ],
            out_specs=pl.BlockSpec((1, Cout, HW), lambda n: (n, 0, 0)),
            scratch_shapes=[
                pltpu.VMEM((Cin, HW + 2 * P), jnp.float32),
                pltpu.VMEM((9 * Cp1, HW), jnp.float32),
                pltpu.VMEM((Cmid, HW + 2 * P), jnp.float32),
                pltpu.VMEM((9 * Cp2, HW), jnp.float32),
            ],
        ),
        compiler_params=pltpu.CompilerParams(
            dimension_semantics=("parallel",)),
    )(x_flat, w1p, b1p, w2p, b2p, masks)

    return out_flat.reshape(N, Cout, H, W)


def _reference_forward(x, params, eps=1e-5, negative_slope=0.01):
    """Pure-JAX reference (lax conv, NCHW) for correctness check."""
    def layer(x, w, cb, g, b, rm, rv):
        y = jax.lax.conv_general_dilated(
            x, w, window_strides=(1, 1), padding=((1, 1), (1, 1)),
            dimension_numbers=("NCHW", "OIHW", "NCHW"),
            precision=jax.lax.Precision.HIGHEST)
        y = y + cb.reshape(1, -1, 1, 1)
        s = (g / jnp.sqrt(rv + eps)).reshape(1, -1, 1, 1)
        t = (b - rm * g / jnp.sqrt(rv + eps)).reshape(1, -1, 1, 1)
        y = y * s + t
        return jnp.maximum(y, negative_slope * y)

    x = layer(x, params["w1"], params["cb1"], params["g1"], params["b1"],
              params["rm1"], params["rv1"])
    x = layer(x, params["w2"], params["cb2"], params["g2"], params["b2"],
              params["rm2"], params["rv2"])
    return x


if __name__ == "__main__":
    key = jax.random.PRNGKey(0)
    N, in_ch, mid_ch, out_ch, H, W = 2, 4, 16, 8, 16, 16

    keys = jax.random.split(key, 10)
    x = jax.random.normal(keys[0], (N, in_ch, H, W), jnp.float32)

    # Deterministic synthetic parameters (Conv2d has bias by default).
    params = {
        "w1": 0.1 * jax.random.normal(keys[1], (mid_ch, in_ch, 3, 3), jnp.float32),
        "cb1": 0.1 * jax.random.normal(keys[2], (mid_ch,), jnp.float32),
        "g1": 1.0 + 0.1 * jax.random.normal(keys[3], (mid_ch,), jnp.float32),
        "b1": 0.1 * jax.random.normal(keys[4], (mid_ch,), jnp.float32),
        "rm1": 0.05 * jnp.arange(mid_ch, dtype=jnp.float32),
        "rv1": 1.0 + 0.02 * jnp.arange(mid_ch, dtype=jnp.float32),
        "w2": 0.1 * jax.random.normal(keys[5], (out_ch, mid_ch, 3, 3), jnp.float32),
        "cb2": 0.1 * jax.random.normal(keys[6], (out_ch,), jnp.float32),
        "g2": 1.0 + 0.1 * jax.random.normal(keys[7], (out_ch,), jnp.float32),
        "b2": 0.1 * jax.random.normal(keys[8], (out_ch,), jnp.float32),
        "rm2": 0.03 * jnp.arange(out_ch, dtype=jnp.float32),
        "rv2": 1.0 + 0.01 * jnp.arange(out_ch, dtype=jnp.float32),
    }

    out = jax.block_until_ready(nested_block_forward(x, params))
    ref = jax.block_until_ready(_reference_forward(x, params))

    assert out.shape == (N, out_ch, H, W), out.shape
    max_err = float(jnp.max(jnp.abs(out - ref)))
    assert jnp.allclose(out, ref, atol=1e-4, rtol=1e-4), max_err
    print("KERNEL_OK")
</pallas_src>

<mosaic_0001>
module attributes {stable_mosaic.version = 11 : i64} {
  func.func @_nested_block_kernel(%arg0: i32, %arg1: memref<1x4x256xf32, #tpu.memory_space<vmem>>, %arg2: memref<16x72xf32, #tpu.memory_space<vmem>>, %arg3: memref<16x1xf32, #tpu.memory_space<vmem>>, %arg4: memref<8x144xf32, #tpu.memory_space<vmem>>, %arg5: memref<8x1xf32, #tpu.memory_space<vmem>>, %arg6: memref<2x256xf32, #tpu.memory_space<vmem>>, %arg7: memref<1x8x256xf32, #tpu.memory_space<vmem>>, %arg8: memref<4x512xf32, #tpu.memory_space<vmem>>, %arg9: memref<72x256xf32, #tpu.memory_space<vmem>>, %arg10: memref<16x512xf32, #tpu.memory_space<vmem>>, %arg11: memref<144x256xf32, #tpu.memory_space<vmem>>) attributes {dimension_semantics = [#tpu.dimension_semantics<parallel>], iteration_bounds = array<i64: 2>, scalar_prefetch = 0 : i64, scratch_operands = 4 : i64, tpu.core_type = #tpu.core_type<tc>, window_params = [{transform_indices = @transform_0, window_bounds = array<i64: 1, 4, 256>}, {pipeline_mode = #tpu.pipeline_mode<synchronous>, transform_indices = @transform_1, window_bounds = array<i64: 16, 72>}, {pipeline_mode = #tpu.pipeline_mode<synchronous>, transform_indices = @transform_2, window_bounds = array<i64: 16, 1>}, {pipeline_mode = #tpu.pipeline_mode<synchronous>, transform_indices = @transform_3, window_bounds = array<i64: 8, 144>}, {pipeline_mode = #tpu.pipeline_mode<synchronous>, transform_indices = @transform_4, window_bounds = array<i64: 8, 1>}, {pipeline_mode = #tpu.pipeline_mode<synchronous>, transform_indices = @transform_5, window_bounds = array<i64: 2, 256>}, {transform_indices = @transform_6, window_bounds = array<i64: 1, 8, 256>}]} {
    %c0 = arith.constant 0 : index
    %c0_0 = arith.constant 0 : index
    %0 = vector.load %arg6[%c0, %c0_0] : memref<2x256xf32, #tpu.memory_space<vmem>>, vector<1x256xf32>
    %c1 = arith.constant 1 : index
    %c0_1 = arith.constant 0 : index
    %1 = vector.load %arg6[%c1, %c0_1] : memref<2x256xf32, #tpu.memory_space<vmem>>, vector<1x256xf32>
    %c0_2 = arith.constant 0 : index
    %c0_3 = arith.constant 0 : index
    %c0_4 = arith.constant 0 : index
    %2 = vector.load %arg1[%c0_2, %c0_3, %c0_4] : memref<1x4x256xf32, #tpu.memory_space<vmem>>, vector<1x4x256xf32>
    %3 = vector.shape_cast %2 : vector<1x4x256xf32> to vector<4x256xf32>
    %cst = arith.constant 0.000000e+00 : f32
    %4 = vector.broadcast %cst : f32 to vector<4x512xf32>
    %c0_5 = arith.constant 0 : index
    %c0_6 = arith.constant 0 : index
    %5 = vector.load %arg8[%c0_5, %c0_6] : memref<4x512xf32, #tpu.memory_space<vmem>>, vector<4x512xf32>
    tpu.vector_store %arg8[%c0_5, %c0_6], %4 {strides = array<i32>} : memref<4x512xf32, #tpu.memory_space<vmem>>, vector<4x512xf32>,
    %cst_7 = arith.constant 0.000000e+00 : f32
    %6 = vector.broadcast %cst_7 : f32 to vector<72x256xf32>
    %c0_8 = arith.constant 0 : index
    %c0_9 = arith.constant 0 : index
    %7 = vector.load %arg9[%c0_8, %c0_9] : memref<72x256xf32, #tpu.memory_space<vmem>>, vector<72x256xf32>
    tpu.vector_store %arg9[%c0_8, %c0_9], %6 {strides = array<i32>} : memref<72x256xf32, #tpu.memory_space<vmem>>, vector<72x256xf32>,
    %c0_10 = arith.constant 0 : index
    %c128 = arith.constant 128 : index
    %8 = vector.load %arg8[%c0_10, %c128] : memref<4x512xf32, #tpu.memory_space<vmem>>, vector<4x256xf32>
    tpu.vector_store %arg8[%c0_10, %c128], %3 {strides = array<i32>} : memref<4x512xf32, #tpu.memory_space<vmem>>, vector<4x256xf32>,
    %c0_11 = arith.constant 0 : index
    %c111 = arith.constant 111 : index
    %9 = vector.load %arg8[%c0_11, %c111] : memref<4x512xf32, #tpu.memory_space<vmem>>, vector<4x256xf32>
    %10 = vector.broadcast %0 : vector<1x256xf32> to vector<4x256xf32>
    %11 = arith.mulf %9, %10 : vector<4x256xf32>
    %c0_12 = arith.constant 0 : index
    %c0_13 = arith.constant 0 : index
    %12 = vector.load %arg9[%c0_12, %c0_13] : memref<72x256xf32, #tpu.memory_space<vmem>>, vector<4x256xf32>
    tpu.vector_store %arg9[%c0_12, %c0_13], %11 {strides = array<i32>} : memref<72x256xf32, #tpu.memory_space<vmem>>, vector<4x256xf32>,
    %c0_14 = arith.constant 0 : index
    %c112 = arith.constant 112 : index
    %13 = vector.load %arg8[%c0_14, %c112] : memref<4x512xf32, #tpu.memory_space<vmem>>, vector<4x256xf32>
    %c8 = arith.constant 8 : index
    %c0_15 = arith.constant 0 : index
    %14 = vector.load %arg9[%c8, %c0_15] : memref<72x256xf32, #tpu.memory_space<vmem>>, vector<4x256xf32>
    tpu.vector_store %arg9[%c8, %c0_15], %13 {strides = array<i32>} : memref<72x256xf32, #tpu.memory_space<vmem>>, vector<4x256xf32>,
    %c0_16 = arith.constant 0 : index
    %c113 = arith.constant 113 : index
    %15 = vector.load %arg8[%c0_16, %c113] : memref<4x512xf32, #tpu.memory_space<vmem>>, vector<4x256xf32>
    %16 = vector.broadcast %1 : vector<1x256xf32> to vector<4x256xf32>
    %17 = arith.mulf %15, %16 : vector<4x256xf32>
    %c16 = arith.constant 16 : index
    %c0_17 = arith.constant 0 : index
    %18 = vector.load %arg9[%c16, %c0_17] : memref<72x256xf32, #tpu.memory_space<vmem>>, vector<4x256xf32>
    tpu.vector_store %arg9[%c16, %c0_17], %17 {strides = array<i32>} : memref<72x256xf32, #tpu.memory_space<vmem>>, vector<4x256xf32>,
    %c0_18 = arith.constant 0 : index
    %c127 = arith.constant 127 : index
    %19 = vector.load %arg8[%c0_18, %c127] : memref<4x512xf32, #tpu.memory_space<vmem>>, vector<4x256xf32>
    %20 = vector.broadcast %0 : vector<1x256xf32> to vector<4x256xf32>
    %21 = arith.mulf %19, %20 : vector<4x256xf32>
    %c24 = arith.constant 24 : index
    %c0_19 = arith.constant 0 : index
    %22 = vector.load %arg9[%c24, %c0_19] : memref<72x256xf32, #tpu.memory_space<vmem>>, vector<4x256xf32>
    tpu.vector_store %arg9[%c24, %c0_19], %21 {strides = array<i32>} : memref<72x256xf32, #tpu.memory_space<vmem>>, vector<4x256xf32>,
    %c0_20 = arith.constant 0 : index
    %c128_21 = arith.constant 128 : index
    %23 = vector.load %arg8[%c0_20, %c128_21] : memref<4x512xf32, #tpu.memory_space<vmem>>, vector<4x256xf32>
    %c32 = arith.constant 32 : index
    %c0_22 = arith.constant 0 : index
    %24 = vector.load %arg9[%c32, %c0_22] : memref<72x256xf32, #tpu.memory_space<vmem>>, vector<4x256xf32>
    tpu.vector_store %arg9[%c32, %c0_22], %23 {strides = array<i32>} : memref<72x256xf32, #tpu.memory_space<vmem>>, vector<4x256xf32>,
    %c0_23 = arith.constant 0 : index
    %c129 = arith.constant 129 : index
    %25 = vector.load %arg8[%c0_23, %c129] : memref<4x512xf32, #tpu.memory_space<vmem>>, vector<4x256xf32>
    %26 = vector.broadcast %1 : vector<1x256xf32> to vector<4x256xf32>
    %27 = arith.mulf %25, %26 : vector<4x256xf32>
    %c40 = arith.constant 40 : index
    %c0_24 = arith.constant 0 : index
    %28 = vector.load %arg9[%c40, %c0_24] : memref<72x256xf32, #tpu.memory_space<vmem>>, vector<4x256xf32>
    tpu.vector_store %arg9[%c40, %c0_24], %27 {strides = array<i32>} : memref<72x256xf32, #tpu.memory_space<vmem>>, vector<4x256xf32>,
    %c0_25 = arith.constant 0 : index
    %c143 = arith.constant 143 : index
    %29 = vector.load %arg8[%c0_25, %c143] : memref<4x512xf32, #tpu.memory_space<vmem>>, vector<4x256xf32>
    %30 = vector.broadcast %0 : vector<1x256xf32> to vector<4x256xf32>
    %31 = arith.mulf %29, %30 : vector<4x256xf32>
    %c48 = arith.constant 48 : index
    %c0_26 = arith.constant 0 : index
    %32 = vector.load %arg9[%c48, %c0_26] : memref<72x256xf32, #tpu.memory_space<vmem>>, vector<4x256xf32>
    tpu.vector_store %arg9[%c48, %c0_26], %31 {strides = array<i32>} : memref<72x256xf32, #tpu.memory_space<vmem>>, vector<4x256xf32>,
    %c0_27 = arith.constant 0 : index
    %c144 = arith.constant 144 : index
    %33 = vector.load %arg8[%c0_27, %c144] : memref<4x512xf32, #tpu.memory_space<vmem>>, vector<4x256xf32>
    %c56 = arith.constant 56 : index
    %c0_28 = arith.constant 0 : index
    %34 = vector.load %arg9[%c56, %c0_28] : memref<72x256xf32, #tpu.memory_space<vmem>>, vector<4x256xf32>
    tpu.vector_store %arg9[%c56, %c0_28], %33 {strides = array<i32>} : memref<72x256xf32, #tpu.memory_space<vmem>>, vector<4x256xf32>,
    %c0_29 = arith.constant 0 : index
    %c145 = arith.constant 145 : index
    %35 = vector.load %arg8[%c0_29, %c145] : memref<4x512xf32, #tpu.memory_space<vmem>>, vector<4x256xf32>
    %36 = vector.broadcast %1 : vector<1x256xf32> to vector<4x256xf32>
    %37 = arith.mulf %35, %36 : vector<4x256xf32>
    %c64 = arith.constant 64 : index
    %c0_30 = arith.constant 0 : index
    %38 = vector.load %arg9[%c64, %c0_30] : memref<72x256xf32, #tpu.memory_space<vmem>>, vector<4x256xf32>
    tpu.vector_store %arg9[%c64, %c0_30], %37 {strides = array<i32>} : memref<72x256xf32, #tpu.memory_space<vmem>>, vector<4x256xf32>,
    %c0_31 = arith.constant 0 : index
    %c0_32 = arith.constant 0 : index
    %39 = vector.load %arg2[%c0_31, %c0_32] : memref<16x72xf32, #tpu.memory_space<vmem>>, vector<16x72xf32>
    %c0_33 = arith.constant 0 : index
    %c0_34 = arith.constant 0 : index
    %40 = vector.load %arg9[%c0_33, %c0_34] : memref<72x256xf32, #tpu.memory_space<vmem>>, vector<72x256xf32>
    %cst_35 = arith.constant dense<0.000000e+00> : vector<16x256xf32>
    %41 = tpu.matmul %39, %40, %cst_35 {dimension_numbers = #tpu.dot_dimension_numbers<[1], [0], [0], [1], [0, 0, 1, 1], [], []>} : vector<16x72xf32>, vector<72x256xf32>, vector<16x256xf32> -> vector<16x256xf32>
    %c0_36 = arith.constant 0 : index
    %c0_37 = arith.constant 0 : index
    %42 = vector.load %arg3[%c0_36, %c0_37] : memref<16x1xf32, #tpu.memory_space<vmem>>, vector<16x1xf32>
    %43 = vector.broadcast %42 : vector<16x1xf32> to vector<16x256xf32>
    %44 = arith.addf %41, %43 : vector<16x256xf32>
    %cst_38 = arith.constant 0.00999999977 : f32
    %45 = vector.broadcast %cst_38 : f32 to vector<16x256xf32>
    %46 = arith.mulf %45, %44 : vector<16x256xf32>
    %47 = arith.maximumf %44, %46 : vector<16x256xf32>
    %cst_39 = arith.constant 0.000000e+00 : f32
    %48 = vector.broadcast %cst_39 : f32 to vector<16x512xf32>
    %c0_40 = arith.constant 0 : index
    %c0_41 = arith.constant 0 : index
    %49 = vector.load %arg10[%c0_40, %c0_41] : memref<16x512xf32, #tpu.memory_space<vmem>>, vector<16x512xf32>
    tpu.vector_store %arg10[%c0_40, %c0_41], %48 {strides = array<i32>} : memref<16x512xf32, #tpu.memory_space<vmem>>, vector<16x512xf32>,
    %c0_42 = arith.constant 0 : index
    %c128_43 = arith.constant 128 : index
    %50 = vector.load %arg10[%c0_42, %c128_43] : memref<16x512xf32, #tpu.memory_space<vmem>>, vector<16x256xf32>
    tpu.vector_store %arg10[%c0_42, %c128_43], %47 {strides = array<i32>} : memref<16x512xf32, #tpu.memory_space<vmem>>, vector<16x256xf32>,
    %c0_44 = arith.constant 0 : index
    %c111_45 = arith.constant 111 : index
    %51 = vector.load %arg10[%c0_44, %c111_45] : memref<16x512xf32, #tpu.memory_space<vmem>>, vector<16x256xf32>
    %52 = vector.broadcast %0 : vector<1x256xf32> to vector<16x256xf32>
    %53 = arith.mulf %51, %52 : vector<16x256xf32>
    %c0_46 = arith.constant 0 : index
    %c0_47 = arith.constant 0 : index
    %54 = vector.load %arg11[%c0_46, %c0_47] : memref<144x256xf32, #tpu.memory_space<vmem>>, vector<16x256xf32>
    tpu.vector_store %arg11[%c0_46, %c0_47], %53 {strides = array<i32>} : memref<144x256xf32, #tpu.memory_space<vmem>>, vector<16x256xf32>,
    %c0_48 = arith.constant 0 : index
    %c112_49 = arith.constant 112 : index
    %55 = vector.load %arg10[%c0_48, %c112_49] : memref<16x512xf32, #tpu.memory_space<vmem>>, vector<16x256xf32>
    %c16_50 = arith.constant 16 : index
    %c0_51 = arith.constant 0 : index
    %56 = vector.load %arg11[%c16_50, %c0_51] : memref<144x256xf32, #tpu.memory_space<vmem>>, vector<16x256xf32>
    tpu.vector_store %arg11[%c16_50, %c0_51], %55 {strides = array<i32>} : memref<144x256xf32, #tpu.memory_space<vmem>>, vector<16x256xf32>,
    %c0_52 = arith.constant 0 : index
    %c113_53 = arith.constant 113 : index
    %57 = vector.load %arg10[%c0_52, %c113_53] : memref<16x512xf32, #tpu.memory_space<vmem>>, vector<16x256xf32>
    %58 = vector.broadcast %1 : vector<1x256xf32> to vector<16x256xf32>
    %59 = arith.mulf %57, %58 : vector<16x256xf32>
    %c32_54 = arith.constant 32 : index
    %c0_55 = arith.constant 0 : index
    %60 = vector.load %arg11[%c32_54, %c0_55] : memref<144x256xf32, #tpu.memory_space<vmem>>, vector<16x256xf32>
    tpu.vector_store %arg11[%c32_54, %c0_55], %59 {strides = array<i32>} : memref<144x256xf32, #tpu.memory_space<vmem>>, vector<16x256xf32>,
    %c0_56 = arith.constant 0 : index
    %c127_57 = arith.constant 127 : index
    %61 = vector.load %arg10[%c0_56, %c127_57] : memref<16x512xf32, #tpu.memory_space<vmem>>, vector<16x256xf32>
    %62 = vector.broadcast %0 : vector<1x256xf32> to vector<16x256xf32>
    %63 = arith.mulf %61, %62 : vector<16x256xf32>
    %c48_58 = arith.constant 48 : index
    %c0_59 = arith.constant 0 : index
    %64 = vector.load %arg11[%c48_58, %c0_59] : memref<144x256xf32, #tpu.memory_space<vmem>>, vector<16x256xf32>
    tpu.vector_store %arg11[%c48_58, %c0_59], %63 {strides = array<i32>} : memref<144x256xf32, #tpu.memory_space<vmem>>, vector<16x256xf32>,
    %c0_60 = arith.constant 0 : index
    %c128_61 = arith.constant 128 : index
    %65 = vector.load %arg10[%c0_60, %c128_61] : memref<16x512xf32, #tpu.memory_space<vmem>>, vector<16x256xf32>
    %c64_62 = arith.constant 64 : index
    %c0_63 = arith.constant 0 : index
    %66 = vector.load %arg11[%c64_62, %c0_63] : memref<144x256xf32, #tpu.memory_space<vmem>>, vector<16x256xf32>
    tpu.vector_store %arg11[%c64_62, %c0_63], %65 {strides = array<i32>} : memref<144x256xf32, #tpu.memory_space<vmem>>, vector<16x256xf32>,
    %c0_64 = arith.constant 0 : index
    %c129_65 = arith.constant 129 : index
    %67 = vector.load %arg10[%c0_64, %c129_65] : memref<16x512xf32, #tpu.memory_space<vmem>>, vector<16x256xf32>
    %68 = vector.broadcast %1 : vector<1x256xf32> to vector<16x256xf32>
    %69 = arith.mulf %67, %68 : vector<16x256xf32>
    %c80 = arith.constant 80 : index
    %c0_66 = arith.constant 0 : index
    %70 = vector.load %arg11[%c80, %c0_66] : memref<144x256xf32, #tpu.memory_space<vmem>>, vector<16x256xf32>
    tpu.vector_store %arg11[%c80, %c0_66], %69 {strides = array<i32>} : memref<144x256xf32, #tpu.memory_space<vmem>>, vector<16x256xf32>,
    %c0_67 = arith.constant 0 : index
    %c143_68 = arith.constant 143 : index
    %71 = vector.load %arg10[%c0_67, %c143_68] : memref<16x512xf32, #tpu.memory_space<vmem>>, vector<16x256xf32>
    %72 = vector.broadcast %0 : vector<1x256xf32> to vector<16x256xf32>
    %73 = arith.mulf %71, %72 : vector<16x256xf32>
    %c96 = arith.constant 96 : index
    %c0_69 = arith.constant 0 : index
    %74 = vector.load %arg11[%c96, %c0_69] : memref<144x256xf32, #tpu.memory_space<vmem>>, vector<16x256xf32>
    tpu.vector_store %arg11[%c96, %c0_69], %73 {strides = array<i32>} : memref<144x256xf32, #tpu.memory_space<vmem>>, vector<16x256xf32>,
    %c0_70 = arith.constant 0 : index
    %c144_71 = arith.constant 144 : index
    %75 = vector.load %arg10[%c0_70, %c144_71] : memref<16x512xf32, #tpu.memory_space<vmem>>, vector<16x256xf32>
    %c112_72 = arith.constant 112 : index
    %c0_73 = arith.constant 0 : index
    %76 = vector.load %arg11[%c112_72, %c0_73] : memref<144x256xf32, #tpu.memory_space<vmem>>, vector<16x256xf32>
    tpu.vector_store %arg11[%c112_72, %c0_73], %75 {strides = array<i32>} : memref<144x256xf32, #tpu.memory_space<vmem>>, vector<16x256xf32>,
    %c0_74 = arith.constant 0 : index
    %c145_75 = arith.constant 145 : index
    %77 = vector.load %arg10[%c0_74, %c145_75] : memref<16x512xf32, #tpu.memory_space<vmem>>, vector<16x256xf32>
    %78 = vector.broadcast %1 : vector<1x256xf32> to vector<16x256xf32>
    %79 = arith.mulf %77, %78 : vector<16x256xf32>
    %c128_76 = arith.constant 128 : index
    %c0_77 = arith.constant 0 : index
    %80 = vector.load %arg11[%c128_76, %c0_77] : memref<144x256xf32, #tpu.memory_space<vmem>>, vector<16x256xf32>
    tpu.vector_store %arg11[%c128_76, %c0_77], %79 {strides = array<i32>} : memref<144x256xf32, #tpu.memory_space<vmem>>, vector<16x256xf32>,
    %c0_78 = arith.constant 0 : index
    %c0_79 = arith.constant 0 : index
    %81 = vector.load %arg4[%c0_78, %c0_79] : memref<8x144xf32, #tpu.memory_space<vmem>>, vector<8x144xf32>
    %c0_80 = arith.constant 0 : index
    %c0_81 = arith.constant 0 : index
    %82 = vector.load %arg11[%c0_80, %c0_81] : memref<144x256xf32, #tpu.memory_space<vmem>>, vector<144x256xf32>
    %cst_82 = arith.constant dense<0.000000e+00> : vector<8x256xf32>
    %83 = tpu.matmul %81, %82, %cst_82 {dimension_numbers = #tpu.dot_dimension_numbers<[1], [0], [0], [1], [0, 0, 1, 1], [], []>} : vector<8x144xf32>, vector<144x256xf32>, vector<8x256xf32> -> vector<8x256xf32>
    %c0_83 = arith.constant 0 : index
    %c0_84 = arith.constant 0 : index
    %84 = vector.load %arg5[%c0_83, %c0_84] : memref<8x1xf32, #tpu.memory_space<vmem>>, vector<8x1xf32>
    %85 = vector.broadcast %84 : vector<8x1xf32> to vector<8x256xf32>
    %86 = arith.addf %83, %85 : vector<8x256xf32>
    %cst_85 = arith.constant 0.00999999977 : f32
    %87 = vector.broadcast %cst_85 : f32 to vector<8x256xf32>
    %88 = arith.mulf %87, %86 : vector<8x256xf32>
    %89 = arith.maximumf %86, %88 : vector<8x256xf32>
    %c0_86 = arith.constant 0 : index
    %c0_87 = arith.constant 0 : index
    %c0_88 = arith.constant 0 : index
    %90 = vector.load %arg7[%c0_86, %c0_87, %c0_88] : memref<1x8x256xf32, #tpu.memory_space<vmem>>, vector<1x8x256xf32>
    %91 = vector.shape_cast %90 : vector<1x8x256xf32> to vector<8x256xf32>
    %92 = vector.shape_cast %89 : vector<8x256xf32> to vector<1x8x256xf32>
    tpu.vector_store %arg7[%c0_86, %c0_87, %c0_88], %92 {strides = array<i32>} : memref<1x8x256xf32, #tpu.memory_space<vmem>>, vector<1x8x256xf32>,
    return
  }
  func.func @transform_0(%arg0: i32) -> (i32, i32, i32) {
    %c0_i32 = arith.constant 0 : i32
    %c0_i32_0 = arith.constant 0 : i32
    %c0_i32_1 = arith.constant 0 : i32
    return %arg0, %c0_i32, %c0_i32_0 : i32, i32, i32
  }
  func.func @transform_1(%arg0: i32) -> (i32, i32) {
    %c0_i32 = arith.constant 0 : i32
    %c0_i32_0 = arith.constant 0 : i32
    %c0_i32_1 = arith.constant 0 : i32
    return %c0_i32, %c0_i32_0 : i32, i32
  }
  func.func @transform_2(%arg0: i32) -> (i32, i32) {
    %c0_i32 = arith.constant 0 : i32
    %c0_i32_0 = arith.constant 0 : i32
    %c0_i32_1 = arith.constant 0 : i32
    return %c0_i32, %c0_i32_0 : i32, i32
  }
  func.func @transform_3(%arg0: i32) -> (i32, i32) {
    %c0_i32 = arith.constant 0 : i32
    %c0_i32_0 = arith.constant 0 : i32
    %c0_i32_1 = arith.constant 0 : i32
    return %c0_i32, %c0_i32_0 : i32, i32
  }
  func.func @transform_4(%arg0: i32) -> (i32, i32) {
    %c0_i32 = arith.constant 0 : i32
    %c0_i32_0 = arith.constant 0 : i32
    %c0_i32_1 = arith.constant 0 : i32
    return %c0_i32, %c0_i32_0 : i32, i32
  }
  func.func @transform_5(%arg0: i32) -> (i32, i32) {
    %c0_i32 = arith.constant 0 : i32
    %c0_i32_0 = arith.constant 0 : i32
    %c0_i32_1 = arith.constant 0 : i32
    return %c0_i32, %c0_i32_0 : i32, i32
  }
  func.func @transform_6(%arg0: i32) -> (i32, i32, i32) {
    %c0_i32 = arith.constant 0 : i32
    %c0_i32_0 = arith.constant 0 : i32
    %c0_i32_1 = arith.constant 0 : i32
    return %arg0, %c0_i32, %c0_i32_0 : i32, i32, i32
  }
}

</mosaic_0001>

<llo_original>
// kernel: tpu_custom_call.1
$region0: #{tpu_custom_call.1}
  #allocation0 [shape = 'u32[]', space=smem, size = 0x4, offset = 0x4, fixed_abs, tag = 'smem constant byte address 0x4 - core index']
  #allocation1 [shape = 'u32[144,128]{1,0:T(1,128)}', space=vmem, size = 0x12000, scoped, tag = 'internal scratch']
  #allocation2 [shape = 'f32[4,512]{1,0:T(4,128)}', space=vmem, size = 0x2000, scoped, tag = 'scratch operand']
  #allocation3 [shape = 'f32[72,256]{1,0:T(8,128)}', space=vmem, size = 0x12000, scoped, tag = 'scratch operand']
  #allocation4 [shape = 'f32[16,512]{1,0:T(8,128)}', space=vmem, size = 0x8000, scoped, tag = 'scratch operand']
  #allocation5 [shape = 'f32[144,256]{1,0:T(8,128)}', space=vmem, size = 0x24000, scoped, tag = 'scratch operand']
  %s0 = inlined_call_operand.vmem [shape: f32[2,4,256], index: 0, kind: input, shape index: {}]
  %s1 = inlined_call_operand.hbm [shape: f32[16,72], index: 1, kind: input, shape index: {}]
  %s2 = inlined_call_operand.vmem [shape: f32[16,1], index: 2, kind: input, shape index: {}]
  %s3 = inlined_call_operand.hbm [shape: f32[8,144], index: 3, kind: input, shape index: {}]
  %s4 = inlined_call_operand.vmem [shape: f32[8,1], index: 4, kind: input, shape index: {}]
  %s5 = inlined_call_operand.vmem [shape: f32[2,256], index: 5, kind: input, shape index: {}]
  %s6 = inlined_call_operand.hbm [shape: f32[2,8,256], index: 6, kind: output, shape index: {}]
  %s7 = sld [smem:[#allocation0]]
  $region65: #{tpu_custom_call.1} parent=0
    _
  %s9 = ssub.s32 1, %s7
  %s10 = scalar_select 0, %s9, %s7
  $region1: #{tpu_custom_call.1} parent=0
    #allocation6 [shape = 'u8[8192]{0}', space=vmem, size = 0x2000, scoped, tag = 'input window, operand 1, single buffered']
    #allocation7 [shape = 's32[2]{0}', space=sflag, size = 0x8, scoped, tag = 'scoped memory for tpu_custom_call.1']
    #allocation8 [shape = 's32[2]{0}', space=sflag, size = 0x8, scoped, tag = 'scoped memory for tpu_custom_call.1']
    #allocation9 [shape = 'u8[8192]{0}', space=vmem, size = 0x2000, scoped, tag = 'input window, operand 3, single buffered']
    #allocation10 [shape = 's32[1]{0}', space=sflag, size = 0x4, scoped, tag = 'scoped memory for tpu_custom_call.1']
    #allocation11 [shape = 'u8[16384]{0}', space=vmem, size = 0x4000, scoped, tag = 'output window, operand 0']
    %11 = vsyncpa [#allocation7], 0
    %12 = vsyncpa [#allocation10], 0
    %13 = vsyncpa [#allocation8], 0
    %s14 = scalar_lea.sflag [#allocation8], 1
    %15 = vsyncpa %s14, 0
    loop: start=0, step=1, limit=4
    $region2: #{tpu_custom_call.1} parent=1 // loop_pre_header
      _
    $region3: #{tpu_custom_call.1} parent=1 // loop_header
      %s17 = sphi 0, %s21
      %p18 = scmp.ge.s32.totalorder %s17, 4
      %s27 = sphi 0, %s29
      %s30 = sphi 0, %s27
      %s31 = sphi 0, %s30
      %s47 = sphi 0, %s31
      %s51 = sphi 0, %s51
      %s53 = sphi 0, %s51
      %s54 = sphi 0, %s53
      %s68 = sphi 0, %s54
      %s72 = sphi 0, %s72
      %s74 = sphi 0, %s72
      %s75 = sphi 0, %s74
      %s89 = sphi 0, %s75
      %s93 = sphi 0, %s93
      %s95 = sphi 0, %s93
      %s96 = sphi 0, %s95
      %s110 = sphi 0, %s96
      %s114 = sphi 0, %s114
      %s116 = sphi 0, %s114
      %s117 = sphi 0, %s116
      %s131 = sphi 0, %s117
      %s135 = sphi 0, %s135
      %s137 = sphi 0, %s135
      %s138 = sphi 0, %s137
      %s152 = sphi 0, %s138
      %s158 = sphi 0, %s160
      %s161 = sphi 0, %s158
      %s162 = sphi 0, %s161
      %s178 = sphi 0, %s162
    $region4: #{tpu_custom_call.1} parent=1 // loop_header_branch
      %20 = sbr.rel (%p18) target = $region8
    $region5: #{tpu_custom_call.1} parent=1 // loop_body
      %s22 = ssub.s32 %s17, 1
      %s23 = ssub.s32 %s17, 2
      %s24 = sadd.s32 %s17, 1
      %s25 = ssub.s32 %s17, %s24
      %p26 = scmp.eq.s32.totalorder %s25, 0
      %s28 = sadd.s32 %s27, 1
      %s29 = scalar_select %p26, %s27, %s28
      %p32 = pneg %p26
      %p33 = scmp.eq.s32.totalorder %s17, 1
      %p34 = por %p32, %p33
      %p35 = scmp.ne.s32.totalorder %s27, %s30
      %p36 = scmp.eq.s32.totalorder %s17, 0
      %p37 = por %p35, %p36
      %p38 = scmp.ne.s32.totalorder %s27, %s30
      %p39 = scmp.eq.s32.totalorder %s22, 1
      %p40 = por %p38, %p39
      %p41 = scmp.ne.s32.totalorder %s30, %s31
      %p42 = scmp.eq.s32.totalorder %s22, 0
      %p43 = por %p41, %p42
      %p44 = scmp.ne.s32.totalorder %s30, %s31
      %p45 = scmp.eq.s32.totalorder %s23, 1
      %p46 = por %p44, %p45
      %p48 = scmp.ne.s32.totalorder %s31, %s47
      %p49 = scmp.eq.s32.totalorder %s23, 0
      %p50 = por %p48, %p49
      %s52 = sadd.s32 %s51, 1
      %p55 = scmp.eq.s32.totalorder %s17, 1
      %p56 = scmp.ne.s32.totalorder %s51, %s53
      %p57 = scmp.eq.s32.totalorder %s17, 0
      %p58 = por %p56, %p57
      %p59 = scmp.ne.s32.totalorder %s51, %s53
      %p60 = scmp.eq.s32.totalorder %s22, 1
      %p61 = por %p59, %p60
      %p62 = scmp.ne.s32.totalorder %s53, %s54
      %p63 = scmp.eq.s32.totalorder %s22, 0
      %p64 = por %p62, %p63
      %p65 = scmp.ne.s32.totalorder %s53, %s54
      %p66 = scmp.eq.s32.totalorder %s23, 1
      %p67 = por %p65, %p66
      %p69 = scmp.ne.s32.totalorder %s54, %s68
      %p70 = scmp.eq.s32.totalorder %s23, 0
      %p71 = por %p69, %p70
      %s73 = sadd.s32 %s72, 1
      %p76 = scmp.eq.s32.totalorder %s17, 1
      %p77 = scmp.ne.s32.totalorder %s72, %s74
      %p78 = scmp.eq.s32.totalorder %s17, 0
      %p79 = por %p77, %p78
      %p80 = scmp.ne.s32.totalorder %s72, %s74
      %p81 = scmp.eq.s32.totalorder %s22, 1
      %p82 = por %p80, %p81
      %p83 = scmp.ne.s32.totalorder %s74, %s75
      %p84 = scmp.eq.s32.totalorder %s22, 0
      %p85 = por %p83, %p84
      %p86 = scmp.ne.s32.totalorder %s74, %s75
      %p87 = scmp.eq.s32.totalorder %s23, 1
      %p88 = por %p86, %p87
      %p90 = scmp.ne.s32.totalorder %s75, %s89
      %p91 = scmp.eq.s32.totalorder %s23, 0
      %p92 = por %p90, %p91
      %s94 = sadd.s32 %s93, 1
      %p97 = scmp.eq.s32.totalorder %s17, 1
      %p98 = scmp.ne.s32.totalorder %s93, %s95
      %p99 = scmp.eq.s32.totalorder %s17, 0
      %p100 = por %p98, %p99
      %p101 = scmp.ne.s32.totalorder %s93, %s95
      %p102 = scmp.eq.s32.totalorder %s22, 1
      %p103 = por %p101, %p102
      %p104 = scmp.ne.s32.totalorder %s95, %s96
      %p105 = scmp.eq.s32.totalorder %s22, 0
      %p106 = por %p104, %p105
      %p107 = scmp.ne.s32.totalorder %s95, %s96
      %p108 = scmp.eq.s32.totalorder %s23, 1
      %p109 = por %p107, %p108
      %p111 = scmp.ne.s32.totalorder %s96, %s110
      %p112 = scmp.eq.s32.totalorder %s23, 0
      %p113 = por %p111, %p112
      %s115 = sadd.s32 %s114, 1
      %p118 = scmp.eq.s32.totalorder %s17, 1
      %p119 = scmp.ne.s32.totalorder %s114, %s116
      %p120 = scmp.eq.s32.totalorder %s17, 0
      %p121 = por %p119, %p120
      %p122 = scmp.ne.s32.totalorder %s114, %s116
      %p123 = scmp.eq.s32.totalorder %s22, 1
      %p124 = por %p122, %p123
      %p125 = scmp.ne.s32.totalorder %s116, %s117
      %p126 = scmp.eq.s32.totalorder %s22, 0
      %p127 = por %p125, %p126
      %p128 = scmp.ne.s32.totalorder %s116, %s117
      %p129 = scmp.eq.s32.totalorder %s23, 1
      %p130 = por %p128, %p129
      %p132 = scmp.ne.s32.totalorder %s117, %s131
      %p133 = scmp.eq.s32.totalorder %s23, 0
      %p134 = por %p132, %p133
      %s136 = sadd.s32 %s135, 1
      %p139 = scmp.eq.s32.totalorder %s17, 1
      %p140 = scmp.ne.s32.totalorder %s135, %s137
      %p141 = scmp.eq.s32.totalorder %s17, 0
      %p142 = por %p140, %p141
      %p143 = scmp.ne.s32.totalorder %s135, %s137
      %p144 = scmp.eq.s32.totalorder %s22, 1
      %p145 = por %p143, %p144
      %p146 = scmp.ne.s32.totalorder %s137, %s138
      %p147 = scmp.eq.s32.totalorder %s22, 0
      %p148 = por %p146, %p147
      %p149 = scmp.ne.s32.totalorder %s137, %s138
      %p150 = scmp.eq.s32.totalorder %s23, 1
      %p151 = por %p149, %p150
      %p153 = scmp.ne.s32.totalorder %s138, %s152
      %p154 = scmp.eq.s32.totalorder %s23, 0
      %p155 = por %p153, %p154
      %s156 = ssub.s32 %s17, %s24
      %p157 = scmp.eq.s32.totalorder %s156, 0
      %s159 = sadd.s32 %s158, 1
      %s160 = scalar_select %p157, %s158, %s159
      %p163 = pneg %p157
      %p164 = scmp.eq.s32.totalorder %s17, 1
      %p165 = por %p163, %p164
      %p166 = scmp.ne.s32.totalorder %s158, %s161
      %p167 = scmp.eq.s32.totalorder %s17, 0
      %p168 = por %p166, %p167
      %p169 = scmp.ne.s32.totalorder %s158, %s161
      %p170 = scmp.eq.s32.totalorder %s22, 1
      %p171 = por %p169, %p170
      %p172 = scmp.ne.s32.totalorder %s161, %s162
      %p173 = scmp.eq.s32.totalorder %s22, 0
      %p174 = por %p172, %p173
      %p175 = scmp.ne.s32.totalorder %s161, %s162
      %p176 = scmp.eq.s32.totalorder %s23, 1
      %p177 = por %p175, %p176
      %p179 = scmp.ne.s32.totalorder %s162, %s178
      %p180 = scmp.eq.s32.totalorder %s23, 0
      %p181 = por %p179, %p180
      %p182 = scmp.le.s32.totalorder 1, %s17
      %p183 = scmp.lt.s32.totalorder %s17, 3
      %p184 = pnand %p182, %p183
      %p185 = pneg %p184
      // Predicated region
      $region9: #{tpu_custom_call.1} parent=5 // pred_check
        _
      $region10: #{tpu_custom_call.1} parent=5 // pred_check_branch
        %187 = sbr.rel (%p184) target = $region12
      $region11: #{tpu_custom_call.1} parent=5 // pred_region
        %s188 = ssub.s32 %s17, 1
        // Predicated region
        $region13: #{tpu_custom_call.1} parent=11 // pred_check
          %p189 = pneg %p64
        $region14: #{tpu_custom_call.1} parent=11 // pred_check_branch
          %191 = sbr.rel (%p189) target = $region16
        $region15: #{tpu_custom_call.1} parent=11 // pred_region
          %s193 = ssub.s32 256, 256
          %194 = vsyncadd [#allocation7], %s193
          %s195 = sshll.u32 [#allocation6], 4
          %s196 = int_to_ptr.vmem [resolvable:$true] %s195
          %201 = dma.hbm_to_vmem [thread:$0]  %s1, 256, %s196, [#allocation7], 128, 128, 8
        $region16: #{tpu_custom_call.1} parent=11 // pred_fallthru
          _
        // Predicated region
        $region17: #{tpu_custom_call.1} parent=11 // pred_check
          %p202 = pneg %p85
        $region18: #{tpu_custom_call.1} parent=11 // pred_check_branch
          %204 = sbr.rel (%p202) target = $region20
        $region19: #{tpu_custom_call.1} parent=11 // pred_region
          _
        $region20: #{tpu_custom_call.1} parent=11 // pred_fallthru
          _
        // Predicated region
        $region21: #{tpu_custom_call.1} parent=11 // pred_check
          %p205 = pneg %p106
        $region22: #{tpu_custom_call.1} parent=11 // pred_check_branch
          %207 = sbr.rel (%p205) target = $region24
        $region23: #{tpu_custom_call.1} parent=11 // pred_region
          %s209 = ssub.s32 256, 256
          %210 = vsyncadd [#allocation10], %s209
          %s212 = sshll.u32 [#allocation9], 4
          %s213 = int_to_ptr.vmem [resolvable:$true] %s212
          %215 = dma.hbm_to_vmem [thread:$0]  %s3, 256, %s213, [#allocation10]
        $region24: #{tpu_custom_call.1} parent=11 // pred_fallthru
          _
        // Predicated region
        $region25: #{tpu_custom_call.1} parent=11 // pred_check
          %p216 = pneg %p127
        $region26: #{tpu_custom_call.1} parent=11 // pred_check_branch
          %218 = sbr.rel (%p216) target = $region28
        $region27: #{tpu_custom_call.1} parent=11 // pred_region
          _
        $region28: #{tpu_custom_call.1} parent=11 // pred_fallthru
          _
        // Predicated region
        $region29: #{tpu_custom_call.1} parent=11 // pred_check
          %p219 = pneg %p148
        $region30: #{tpu_custom_call.1} parent=11 // pred_check_branch
          %221 = sbr.rel (%p219) target = $region32
        $region31: #{tpu_custom_call.1} parent=11 // pred_region
          _
        $region32: #{tpu_custom_call.1} parent=11 // pred_fallthru
          _
      $region12: #{tpu_custom_call.1} parent=5 // pred_fallthru
        _
      %p222 = scmp.lt.s32.totalorder %s17, 2
      // Predicated region
      $region33: #{tpu_custom_call.1} parent=5 // pred_check
        %p223 = pneg %p222
      $region34: #{tpu_custom_call.1} parent=5 // pred_check_branch
        %225 = sbr.rel (%p223) target = $region36
      $region35: #{tpu_custom_call.1} parent=5 // pred_region
        // Predicated region
        $region37: #{tpu_custom_call.1} parent=35 // pred_check
          %p226 = pneg %p37
        $region38: #{tpu_custom_call.1} parent=35 // pred_check_branch
          %228 = sbr.rel (%p226) target = $region40
        $region39: #{tpu_custom_call.1} parent=35 // pred_region
          %p229 = scmp.lt.s32.totalorder %s17, 1
          %s230 = scalar_select %p229, %s17, 1
          %s231 = smul.addr %s230, 2
          %s232 = smul.addr %s231, 4
          %s233 = scalar_lea.vmem %s0, %s232
        $region40: #{tpu_custom_call.1} parent=35 // pred_fallthru
          _
      $region36: #{tpu_custom_call.1} parent=5 // pred_fallthru
        _
      %p234 = scmp.le.s32.totalorder 1, %s17
      %p235 = scmp.lt.s32.totalorder %s17, 3
      %p236 = pnand %p234, %p235
      %p237 = pneg %p236
      // Predicated region
      $region41: #{tpu_custom_call.1} parent=5 // pred_check
        _
      $region42: #{tpu_custom_call.1} parent=5 // pred_check_branch
        %239 = sbr.rel (%p236) target = $region44
      $region43: #{tpu_custom_call.1} parent=5 // pred_region
        %s240 = ssub.s32 %s17, 1
        // Predicated region
        $region45: #{tpu_custom_call.1} parent=43 // pred_check
          %p241 = pneg %p64
        $region46: #{tpu_custom_call.1} parent=43 // pred_check_branch
          %243 = sbr.rel (%p241) target = $region48
        $region47: #{tpu_custom_call.1} parent=43 // pred_region
          %244 = dma.done [#allocation7], 256
        $region48: #{tpu_custom_call.1} parent=43 // pred_fallthru
          _
        // Predicated region
        $region49: #{tpu_custom_call.1} parent=43 // pred_check
          %p245 = pneg %p106
        $region50: #{tpu_custom_call.1} parent=43 // pred_check_branch
          %247 = sbr.rel (%p245) target = $region52
        $region51: #{tpu_custom_call.1} parent=43 // pred_region
          %248 = dma.done [#allocation10], 256
        $region52: #{tpu_custom_call.1} parent=43 // pred_fallthru
          _
        %p249 = scmp.lt.s32.totalorder %s22, 1
        %s250 = scalar_select %p249, %s22, 1
        %s251 = smul.addr %s250, 2
        %s252 = smul.addr %s251, 4
        %s253 = scalar_lea.vmem %s0, %s252
        %p254 = pneg %p43
        %p255 = pneg %p40
        %p256 = pneg %p64
        %p257 = pneg %p61
        %p258 = pneg %p85
        %p259 = pneg %p82
        %p260 = pneg %p106
        %p261 = pneg %p103
        %p262 = pneg %p127
        %p263 = pneg %p124
        %p264 = pneg %p148
        %p265 = pneg %p145
        %p266 = pneg %p174
        %p267 = pneg %p171
        %s268 = sand.u32 %s161, 1
        %s269 = scalar_lea.sflag [#allocation8], %s268
        %s270 = sand.u32 %s161, 1
        %s271 = smul.addr %s270, 16
        %s272 = scalar_lea.vmem [#allocation11], %s271
        %p273 = scmp.lt.s32.totalorder %s22, 1
        %s274 = scalar_select %p273, %s22, 1
        %s275 = smul.addr %s274, 2
        %s276 = smul.addr %s275, 4
        %s277 = scalar_lea.vmem %s0, %s276
        %v278 = vld [vmem:[%s5] ss:$2 sm:$0x3]
        %s279 = scalar_lea.vmem %s5, 1
        %v280 = vld [vmem:[%s279] ss:$2 sm:$0x3]
        %v281 = vld [vmem:[%s277] sm:$0xff]
        %282 = vst [vmem:[#allocation2] sm:$0xff] 0.0
        %283 = vst [vmem:[#allocation2 + $0x8] sm:$0xff] 0.0
        %284 = vst [vmem:[#allocation3] sm:$0xff] 0.0
        %285 = vst [vmem:[#allocation3 + $0x8] sm:$0xff] 0.0
        %286 = vst [vmem:[#allocation3 + $0x10] sm:$0xff] 0.0
        %287 = vst [vmem:[#allocation3 + $0x18] sm:$0xff] 0.0
        %288 = vst [vmem:[#allocation3 + $0x20] sm:$0xff] 0.0
        %289 = vst [vmem:[#allocation3 + $0x28] sm:$0xff] 0.0
        %290 = vst [vmem:[#allocation3 + $0x30] sm:$0xff] 0.0
        %291 = vst [vmem:[#allocation3 + $0x38] sm:$0xff] 0.0
        %292 = vst [vmem:[#allocation3 + $0x40] sm:$0xff] 0.0
        %293 = vst [vmem:[#allocation3 + $0x48] sm:$0xff] 0.0
        %294 = vst [vmem:[#allocation3 + $0x50] sm:$0xff] 0.0
        %295 = vst [vmem:[#allocation3 + $0x58] sm:$0xff] 0.0
        %296 = vst [vmem:[#allocation3 + $0x60] sm:$0xff] 0.0
        %297 = vst [vmem:[#allocation3 + $0x68] sm:$0xff] 0.0
        %298 = vst [vmem:[#allocation3 + $0x70] sm:$0xff] 0.0
        %299 = vst [vmem:[#allocation3 + $0x78] sm:$0xff] 0.0
        %300 = vst [vmem:[#allocation3 + $0x80] sm:$0xff] 0.0
        %301 = vst [vmem:[#allocation3 + $0x88] sm:$0xff] 0.0
        %302 = vst [vmem:[#allocation2 + $0x4] sm:$0xff] %v281
        %v303 = vld [vmem:[#allocation2] sm:$0xff]
        %v304 = vld [vmem:[#allocation2 + $0x8] sm:$0xf]
        %v306 = vlaneseq
        %v307 = vshrl.u32 %v306, 7
        %v308 = vsub.s32 0, %v307
        %v309 = vrot.slane %v278, %v308
        %v310 = vlaneseq
        %v311 = vshrl.u32 %v310, 7
        %v312 = vsub.s32 1, %v311
        %v313 = vrot.slane %v278, %v312
        %v314 = vcombine.low %v309, %v313
        %315 = vrot.lane.b32.xlu0 %v314, 111
        %v316 = vpop.permute.xlu0 %315
        %v317 = vrot.slane %v316, 4
        %vm318 = vcmask 908288
        %v319 = vsel %vm318, %v317, %v316
        %v322 = vmul.f32 %v303, %v319
        %v323 = vmul.f32 %v304, %v317
        %v326 = vcombine.high %v322, %v322
        %327 = vrot.lane.b32.xlu0 %v322, 17
        %v328 = vpop.permute.xlu0 %327
        %329 = vrot.lane.b32.xlu0 %v326, 17
        %v330 = vpop.permute.xlu0 %329
        %331 = vrot.lane.b32.xlu0 %v323, 17
        %v332 = vpop.permute.xlu0 %331
        %vm333 = vcmask 138240
        %v334 = vsel %vm333, %v328, %v330
        %v335 = vsel %vm333, %v330, %v332
        %338 = vst [vmem:[#allocation3] sm:$0xf] %v334
        %339 = vst [vmem:[#allocation3 + $0x8] sm:$0xf] %v335
        %v340 = vld [vmem:[#allocation2] sm:$0xff]
        %v341 = vld [vmem:[#allocation2 + $0x8] sm:$0xf]
        %v344 = vcombine.high %v340, %v340
        %345 = vrot.lane.b32.xlu0 %v340, 16
        %v346 = vpop.permute.xlu0 %345
        %347 = vrot.lane.b32.xlu0 %v344, 16
        %v348 = vpop.permute.xlu0 %347
        %349 = vrot.lane.b32.xlu0 %v341, 16
        %v350 = vpop.permute.xlu0 %349
        %vm351 = vcmask 130048
        %v352 = vsel %vm351, %v346, %v348
        %v353 = vsel %vm351, %v348, %v350
        %356 = vst [vmem:[#allocation3 + $0x10] sm:$0xf] %v352
        %357 = vst [vmem:[#allocation3 + $0x18] sm:$0xf] %v353
        %v358 = vld [vmem:[#allocation2] sm:$0xff]
        %v359 = vld [vmem:[#allocation2 + $0x8] sm:$0xf]
        %v361 = vlaneseq
        %v362 = vshrl.u32 %v361, 7
        %v363 = vsub.s32 0, %v362
        %v364 = vrot.slane %v280, %v363
        %v365 = vlaneseq
        %v366 = vshrl.u32 %v365, 7
        %v367 = vsub.s32 1, %v366
        %v368 = vrot.slane %v280, %v367
        %v369 = vcombine.low %v364, %v368
        %370 = vrot.lane.b32.xlu0 %v369, 113
        %v371 = vpop.permute.xlu0 %370
        %v372 = vrot.slane %v371, 4
        %vm373 = vcmask 924672
        %v374 = vsel %vm373, %v372, %v371
        %v377 = vmul.f32 %v358, %v374
        %v378 = vmul.f32 %v359, %v372
        %v381 = vcombine.high %v377, %v377
        %382 = vrot.lane.b32.xlu0 %v377, 15
        %v383 = vpop.permute.xlu0 %382
        %384 = vrot.lane.b32.xlu0 %v381, 15
        %v385 = vpop.permute.xlu0 %384
        %386 = vrot.lane.b32.xlu0 %v378, 15
        %v387 = vpop.permute.xlu0 %386
        %vm388 = vcmask 121856
        %v389 = vsel %vm388, %v383, %v385
        %v390 = vsel %vm388, %v385, %v387
        %393 = vst [vmem:[#allocation3 + $0x20] sm:$0xf] %v389
        %394 = vst [vmem:[#allocation3 + $0x28] sm:$0xf] %v390
        %v395 = vld [vmem:[#allocation2] sm:$0xff]
        %v396 = vld [vmem:[#allocation2 + $0x8] sm:$0xf]
        %397 = vrot.lane.b32.xlu0 %v314, 127
        %v398 = vpop.permute.xlu0 %397
        %v399 = vrot.slane %v398, 4
        %vm400 = vcmask 1039360
        %v401 = vsel %vm400, %v399, %v398
        %v404 = vmul.f32 %v395, %v401
        %v405 = vmul.f32 %v396, %v399
        %v408 = vcombine.high %v404, %v404
        %409 = vrot.lane.b32.xlu0 %v404, 1
        %v410 = vpop.permute.xlu0 %409
        %411 = vrot.lane.b32.xlu0 %v408, 1
        %v412 = vpop.permute.xlu0 %411
        %413 = vrot.lane.b32.xlu0 %v405, 1
        %v414 = vpop.permute.xlu0 %413
        %vm415 = vcmask 7168
        %v416 = vsel %vm415, %v410, %v412
        %v417 = vsel %vm415, %v412, %v414
        %420 = vst [vmem:[#allocation3 + $0x30] sm:$0xf] %v416
        %421 = vst [vmem:[#allocation3 + $0x38] sm:$0xf] %v417
        %v422 = vld [vmem:[#allocation2 + $0x4] sm:$0xff]
        %v424 = vcombine.high %v422, %v422
        %426 = vst [vmem:[#allocation3 + $0x40] sm:$0xf] %v422
        %427 = vst [vmem:[#allocation3 + $0x48] sm:$0xf] %v424
        %v428 = vld [vmem:[#allocation2 + $0x4] sm:$0xff]
        %v429 = vld [vmem:[#allocation2 + $0xc] sm:$0xf]
        %430 = vrot.lane.b32.xlu0 %v369, 1
        %v431 = vpop.permute.xlu0 %430
        %v432 = vrot.slane %v431, 4
        %v433 = vsel %vm415, %v432, %v431
        %v436 = vmul.f32 %v428, %v433
        %v437 = vmul.f32 %v429, %v432
        %v440 = vcombine.high %v436, %v436
        %441 = vrot.lane.b32.xlu0 %v436, 127
        %v442 = vpop.permute.xlu0 %441
        %443 = vrot.lane.b32.xlu0 %v440, 127
        %v444 = vpop.permute.xlu0 %443
        %445 = vrot.lane.b32.xlu0 %v437, 127
        %v446 = vpop.permute.xlu0 %445
        %v447 = vsel %vm400, %v442, %v444
        %v448 = vsel %vm400, %v444, %v446
        %451 = vst [vmem:[#allocation3 + $0x50] sm:$0xf] %v447
        %452 = vst [vmem:[#allocation3 + $0x58] sm:$0xf] %v448
        %v453 = vld [vmem:[#allocation2 + $0x4] sm:$0xff]
        %v454 = vld [vmem:[#allocation2 + $0xc] sm:$0xf]
        %455 = vrot.lane.b32.xlu0 %v314, 15
        %v456 = vpop.permute.xlu0 %455
        %v457 = vrot.slane %v456, 4
        %v458 = vsel %vm388, %v457, %v456
        %v461 = vmul.f32 %v453, %v458
        %v462 = vmul.f32 %v454, %v457
        %v465 = vcombine.high %v461, %v461
        %466 = vrot.lane.b32.xlu0 %v461, 113
        %v467 = vpop.permute.xlu0 %466
        %468 = vrot.lane.b32.xlu0 %v465, 113
        %v469 = vpop.permute.xlu0 %468
        %470 = vrot.lane.b32.xlu0 %v462, 113
        %v471 = vpop.permute.xlu0 %470
        %v472 = vsel %vm373, %v467, %v469
        %v473 = vsel %vm373, %v469, %v471
        %476 = vst [vmem:[#allocation3 + $0x60] sm:$0xf] %v472
        %477 = vst [vmem:[#allocation3 + $0x68] sm:$0xf] %v473
        %v478 = vld [vmem:[#allocation2 + $0x4] sm:$0xff]
        %v479 = vld [vmem:[#allocation2 + $0xc] sm:$0xf]
        %v482 = vcombine.high %v478, %v478
        %483 = vrot.lane.b32.xlu0 %v478, 112
        %v484 = vpop.permute.xlu0 %483
        %485 = vrot.lane.b32.xlu0 %v482, 112
        %v486 = vpop.permute.xlu0 %485
        %487 = vrot.lane.b32.xlu0 %v479, 112
        %v488 = vpop.permute.xlu0 %487
        %vm489 = vcmask 916480
        %v490 = vsel %vm489, %v484, %v486
        %v491 = vsel %vm489, %v486, %v488
        %494 = vst [vmem:[#allocation3 + $0x70] sm:$0xf] %v490
        %495 = vst [vmem:[#allocation3 + $0x78] sm:$0xf] %v491
        %v496 = vld [vmem:[#allocation2 + $0x4] sm:$0xff]
        %v497 = vld [vmem:[#allocation2 + $0xc] sm:$0xf]
        %498 = vrot.lane.b32.xlu0 %v369, 17
        %v499 = vpop.permute.xlu0 %498
        %v500 = vrot.slane %v499, 4
        %v501 = vsel %vm333, %v500, %v499
        %v504 = vmul.f32 %v496, %v501
        %v505 = vmul.f32 %v497, %v500
        %v508 = vcombine.high %v504, %v504
        %509 = vrot.lane.b32.xlu0 %v504, 111
        %v510 = vpop.permute.xlu0 %509
        %511 = vrot.lane.b32.xlu0 %v508, 111
        %v512 = vpop.permute.xlu0 %511
        %513 = vrot.lane.b32.xlu0 %v505, 111
        %v514 = vpop.permute.xlu0 %513
        %v515 = vsel %vm318, %v510, %v512
        %v516 = vsel %vm318, %v512, %v514
        %519 = vst [vmem:[#allocation3 + $0x80] sm:$0xf] %v515
        %520 = vst [vmem:[#allocation3 + $0x88] sm:$0xf] %v516
        %v521 = vld [vmem:[#allocation6] sm:$0xff]
        %v522 = vld [vmem:[#allocation6 + $0x8] sm:$0xff]
        %v523 = vld [vmem:[#allocation3] sm:$0xff]
        %v524 = vld [vmem:[#allocation3 + $0x8] sm:$0xff]
        %v525 = vld [vmem:[#allocation3 + $0x10] sm:$0xff]
        %v526 = vld [vmem:[#allocation3 + $0x18] sm:$0xff]
        %v527 = vld [vmem:[#allocation3 + $0x20] sm:$0xff]
        %v528 = vld [vmem:[#allocation3 + $0x28] sm:$0xff]
        %v529 = vld [vmem:[#allocation3 + $0x30] sm:$0xff]
        %v530 = vld [vmem:[#allocation3 + $0x38] sm:$0xff]
        %v531 = vld [vmem:[#allocation3 + $0x40] sm:$0xff]
        %v532 = vld [vmem:[#allocation3 + $0x48] sm:$0xff]
        %v533 = vld [vmem:[#allocation3 + $0x50] sm:$0xff]
        %v534 = vld [vmem:[#allocation3 + $0x58] sm:$0xff]
        %v535 = vld [vmem:[#allocation3 + $0x60] sm:$0xff]
        %v536 = vld [vmem:[#allocation3 + $0x68] sm:$0xff]
        %v537 = vld [vmem:[#allocation3 + $0x70] sm:$0xff]
        %v538 = vld [vmem:[#allocation3 + $0x78] sm:$0xff]
        %v539 = vld [vmem:[#allocation3 + $0x80] sm:$0xff]
        %v540 = vld [vmem:[#allocation3 + $0x88] sm:$0xff]
        %v541 = vld [vmem:[%s2] sm:$0xff]
        %v542 = vld [vmem:[%s2 + $0x8] sm:$0xff]
        %544 = vset.pattern.permute.xlu0 0
        %545 = vperm.xlu0 %544, %v541
        %v546 = vpop.permute.xlu0 %545
        %549 = vset.pattern.permute.xlu0 0
        %550 = vperm.xlu0 %549, %v542
        %v551 = vpop.permute.xlu0 %550
        %vm553 = vcmask 588800
        %v555 = vsel %vm553, %v521, 0
        %v558 = vsel %vm553, %v522, 0
        %560 = vmatprep.subr.mxu0 0.0
        %561 = vmatpush1.msra.mxu0 0.0
        %562 = vmatprep.subr.mxu0 0.0
        %563 = vmatpush1.msra.mxu0 0.0
        %564 = vmatprep.subr.mxu0 0.0
        %565 = vmatpush1.msra.mxu0 0.0
        %566 = vmatprep.subr.mxu0 0.0
        %567 = vmatpush1.msra.mxu0 0.0
        %568 = vmatprep.subr.mxu0 0.0
        %569 = vmatpush1.msra.mxu0 0.0
        %570 = vmatprep.subr.mxu0 0.0
        %571 = vmatpush1.msra.mxu0 0.0
        %572 = vmatprep.subr.mxu0 0.0
        %573 = vmatpush1.msra.mxu0 0.0
        %574 = vmatprep.subr.mxu0 %v540
        %575 = vmatpush1.msra.mxu0 %v539
        %576 = vmatprep.subr.mxu0 %v538
        %577 = vmatpush1.msra.mxu0 %v537
        %578 = vmatprep.subr.mxu0 %v536
        %579 = vmatpush1.msra.mxu0 %v535
        %580 = vmatprep.subr.mxu0 %v534
        %581 = vmatpush1.msra.mxu0 %v533
        %582 = vmatprep.subr.mxu0 %v532
        %583 = vmatpush1.msra.mxu0 %v531
        %584 = vmatprep.subr.mxu0 %v530
        %585 = vmatpush1.msra.mxu0 %v529
        %586 = vmatprep.subr.mxu0 %v528
        %587 = vmatpush1.msra.mxu0 %v527
        %588 = vmatprep.subr.mxu0 %v526
        %589 = vmatpush1.msra.mxu0 %v525
        %590 = vmatprep.subr.mxu0 %v524
        %591 = vmatpush1.msra.mxu0 %v523
        %592 = vmatprep.subr.mxu0 0.0
        %593 = vmatpush2.msra.mxu0 0.0
        %594 = vmatprep.subr.mxu0 0.0
        %595 = vmatpush2.msra.mxu0 0.0
        %596 = vmatprep.subr.mxu0 0.0
        %597 = vmatpush2.msra.mxu0 0.0
        %598 = vmatprep.subr.mxu0 0.0
        %599 = vmatpush2.msra.mxu0 0.0
        %600 = vmatprep.subr.mxu0 0.0
        %601 = vmatpush2.msra.mxu0 0.0
        %602 = vmatprep.subr.mxu0 0.0
        %603 = vmatpush2.msra.mxu0 0.0
        %604 = vmatprep.subr.mxu0 0.0
        %605 = vmatpush2.msra.mxu0 0.0
        %606 = vmatprep.subr.mxu0 0.0
        %607 = vmatpush2.msra.mxu0 0.0
        %608 = vmatprep.subr.mxu0 0.0
        %609 = vmatpush2.msra.mxu0 0.0
        %610 = vmatprep.subr.mxu0 0.0
        %611 = vmatpush2.msra.mxu0 0.0
        %612 = vmatprep.subr.mxu0 0.0
        %613 = vmatpush2.msra.mxu0 0.0
        %614 = vmatprep.subr.mxu0 0.0
        %615 = vmatpush2.msra.mxu0 0.0
        %616 = vmatprep.subr.mxu0 0.0
        %617 = vmatpush2.msra.mxu0 0.0
        %618 = vmatprep.subr.mxu0 0.0
        %619 = vmatpush2.msra.mxu0 0.0
        %620 = vmatprep.subr.mxu0 0.0
        %621 = vmatpush2.msra.mxu0 0.0
        %622 = vmatprep.subr.mxu0 0.0
        %623 = vmatpush2.msra.mxu0 0.0
        %624 = vmatprep.mubr.f32.mxu0 0.0
        %625 = vmatmul.mubr.f32.gmra.mxu0 %v555
        %v626 = vpop.f32.mrf.mxu0
        %v627 = vadd.f32 %v546, %v626
        %v628 = vpop.f32.mrf.mxu0
        %v629 = vadd.f32 %v546, %v628
        %630 = vmatprep.mubr.f32.mxu0 0.0
        %631 = vmatmul.mubr.f32.gmra.mxu0 %v558
        %v632 = vpop.f32.mrf.mxu0
        %v633 = vadd.f32 %v551, %v632
        %v634 = vpop.f32.mrf.mxu0
        %v635 = vadd.f32 %v551, %v634
        %636 = vdwg.mxu0
        %v637 = vmul.f32 %v627, 0.01
        %v638 = vmul.f32 %v629, 0.01
        %v639 = vmul.f32 %v633, 0.01
        %v640 = vmul.f32 %v635, 0.01
        %v641 = vmax.f32 %v627, %v637
        %v642 = vmax.f32 %v629, %v638
        %v643 = vmax.f32 %v633, %v639
        %v644 = vmax.f32 %v635, %v640
        %645 = vst [vmem:[#allocation4] sm:$0xff] 0.0
        %646 = vst [vmem:[#allocation4 + $0x8] sm:$0xff] 0.0
        %647 = vst [vmem:[#allocation4 + $0x10] sm:$0xff] 0.0
        %648 = vst [vmem:[#allocation4 + $0x18] sm:$0xff] 0.0
        %649 = vst [vmem:[#allocation4 + $0x20] sm:$0xff] 0.0
        %650 = vst [vmem:[#allocation4 + $0x28] sm:$0xff] 0.0
        %651 = vst [vmem:[#allocation4 + $0x30] sm:$0xff] 0.0
        %652 = vst [vmem:[#allocation4 + $0x38] sm:$0xff] 0.0
        %653 = vst [vmem:[#allocation4 + $0x8] sm:$0xff] %v641
        %654 = vst [vmem:[#allocation4 + $0x10] sm:$0xff] %v642
        %655 = vst [vmem:[#allocation4 + $0x28] sm:$0xff] %v643
        %656 = vst [vmem:[#allocation4 + $0x30] sm:$0xff] %v644
        %v657 = vld [vmem:[#allocation4] sm:$0xff]
        %v658 = vld [vmem:[#allocation4 + $0x8] sm:$0xff]
        %v659 = vld [vmem:[#allocation4 + $0x10] sm:$0xff]
        %v660 = vld [vmem:[#allocation4 + $0x20] sm:$0xff]
        %v661 = vld [vmem:[#allocation4 + $0x28] sm:$0xff]
        %v662 = vld [vmem:[#allocation4 + $0x30] sm:$0xff]
        %663 = vrot.lane.b32.xlu0 %v309, 111
        %v664 = vpop.permute.xlu0 %663
        %665 = vrot.lane.b32.xlu0 %v313, 111
        %v666 = vpop.permute.xlu0 %665
        %v667 = vsel %vm318, %v664, %v666
        %v671 = vmul.f32 %v657, %v664
        %v672 = vmul.f32 %v658, %v667
        %v673 = vmul.f32 %v659, %v666
        %v674 = vmul.f32 %v660, %v664
        %v675 = vmul.f32 %v661, %v667
        %v676 = vmul.f32 %v662, %v666
        %683 = vrot.lane.b32.xlu0 %v671, 17
        %v684 = vpop.permute.xlu0 %683
        %685 = vrot.lane.b32.xlu0 %v672, 17
        %v686 = vpop.permute.xlu0 %685
        %687 = vrot.lane.b32.xlu0 %v673, 17
        %v688 = vpop.permute.xlu0 %687
        %689 = vrot.lane.b32.xlu0 %v674, 17
        %v690 = vpop.permute.xlu0 %689
        %691 = vrot.lane.b32.xlu0 %v675, 17
        %v692 = vpop.permute.xlu0 %691
        %693 = vrot.lane.b32.xlu0 %v676, 17
        %v694 = vpop.permute.xlu0 %693
        %v695 = vsel %vm333, %v684, %v686
        %v696 = vsel %vm333, %v686, %v688
        %v697 = vsel %vm333, %v690, %v692
        %v698 = vsel %vm333, %v692, %v694
        %703 = vst [vmem:[#allocation5] sm:$0xff] %v695
        %704 = vst [vmem:[#allocation5 + $0x8] sm:$0xff] %v696
        %705 = vst [vmem:[#allocation5 + $0x10] sm:$0xff] %v697
        %706 = vst [vmem:[#allocation5 + $0x18] sm:$0xff] %v698
        %v707 = vld [vmem:[#allocation4] sm:$0xff]
        %v708 = vld [vmem:[#allocation4 + $0x8] sm:$0xff]
        %v709 = vld [vmem:[#allocation4 + $0x10] sm:$0xff]
        %v710 = vld [vmem:[#allocation4 + $0x20] sm:$0xff]
        %v711 = vld [vmem:[#allocation4 + $0x28] sm:$0xff]
        %v712 = vld [vmem:[#allocation4 + $0x30] sm:$0xff]
        %719 = vrot.lane.b32.xlu0 %v707, 16
        %v720 = vpop.permute.xlu0 %719
        %721 = vrot.lane.b32.xlu0 %v708, 16
        %v722 = vpop.permute.xlu0 %721
        %723 = vrot.lane.b32.xlu0 %v709, 16
        %v724 = vpop.permute.xlu0 %723
        %725 = vrot.lane.b32.xlu0 %v710, 16
        %v726 = vpop.permute.xlu0 %725
        %727 = vrot.lane.b32.xlu0 %v711, 16
        %v728 = vpop.permute.xlu0 %727
        %729 = vrot.lane.b32.xlu0 %v712, 16
        %v730 = vpop.permute.xlu0 %729
        %v731 = vsel %vm351, %v720, %v722
        %v732 = vsel %vm351, %v722, %v724
        %v733 = vsel %vm351, %v726, %v728
        %v734 = vsel %vm351, %v728, %v730
        %739 = vst [vmem:[#allocation5 + $0x20] sm:$0xff] %v731
        %740 = vst [vmem:[#allocation5 + $0x28] sm:$0xff] %v732
        %741 = vst [vmem:[#allocation5 + $0x30] sm:$0xff] %v733
        %742 = vst [vmem:[#allocation5 + $0x38] sm:$0xff] %v734
        %v743 = vld [vmem:[#allocation4] sm:$0xff]
        %v744 = vld [vmem:[#allocation4 + $0x8] sm:$0xff]
        %v745 = vld [vmem:[#allocation4 + $0x10] sm:$0xff]
        %v746 = vld [vmem:[#allocation4 + $0x20] sm:$0xff]
        %v747 = vld [vmem:[#allocation4 + $0x28] sm:$0xff]
        %v748 = vld [vmem:[#allocation4 + $0x30] sm:$0xff]
        %749 = vrot.lane.b32.xlu0 %v364, 113
        %v750 = vpop.permute.xlu0 %749
        %751 = vrot.lane.b32.xlu0 %v368, 113
        %v752 = vpop.permute.xlu0 %751
        %v753 = vsel %vm373, %v750, %v752
        %v757 = vmul.f32 %v743, %v750
        %v758 = vmul.f32 %v744, %v753
        %v759 = vmul.f32 %v745, %v752
        %v760 = vmul.f32 %v746, %v750
        %v761 = vmul.f32 %v747, %v753
        %v762 = vmul.f32 %v748, %v752
        %769 = vrot.lane.b32.xlu0 %v757, 15
        %v770 = vpop.permute.xlu0 %769
        %771 = vrot.lane.b32.xlu0 %v758, 15
        %v772 = vpop.permute.xlu0 %771
        %773 = vrot.lane.b32.xlu0 %v759, 15
        %v774 = vpop.permute.xlu0 %773
        %775 = vrot.lane.b32.xlu0 %v760, 15
        %v776 = vpop.permute.xlu0 %775
        %777 = vrot.lane.b32.xlu0 %v761, 15
        %v778 = vpop.permute.xlu0 %777
        %779 = vrot.lane.b32.xlu0 %v762, 15
        %v780 = vpop.permute.xlu0 %779
        %v781 = vsel %vm388, %v770, %v772
        %v782 = vsel %vm388, %v772, %v774
        %v783 = vsel %vm388, %v776, %v778
        %v784 = vsel %vm388, %v778, %v780
        %789 = vst [vmem:[#allocation5 + $0x40] sm:$0xff] %v781
        %790 = vst [vmem:[#allocation5 + $0x48] sm:$0xff] %v782
        %791 = vst [vmem:[#allocation5 + $0x50] sm:$0xff] %v783
        %792 = vst [vmem:[#allocation5 + $0x58] sm:$0xff] %v784
        %v793 = vld [vmem:[#allocation4] sm:$0xff]
        %v794 = vld [vmem:[#allocation4 + $0x8] sm:$0xff]
        %v795 = vld [vmem:[#allocation4 + $0x10] sm:$0xff]
        %v796 = vld [vmem:[#allocation4 + $0x20] sm:$0xff]
        %v797 = vld [vmem:[#allocation4 + $0x28] sm:$0xff]
        %v798 = vld [vmem:[#allocation4 + $0x30] sm:$0xff]
        %799 = vrot.lane.b32.xlu0 %v309, 127
        %v800 = vpop.permute.xlu0 %799
        %801 = vrot.lane.b32.xlu0 %v313, 127
        %v802 = vpop.permute.xlu0 %801
        %v803 = vsel %vm400, %v800, %v802
        %v807 = vmul.f32 %v793, %v800
        %v808 = vmul.f32 %v794, %v803
        %v809 = vmul.f32 %v795, %v802
        %v810 = vmul.f32 %v796, %v800
        %v811 = vmul.f32 %v797, %v803
        %v812 = vmul.f32 %v798, %v802
        %819 = vrot.lane.b32.xlu0 %v807, 1
        %v820 = vpop.permute.xlu0 %819
        %821 = vrot.lane.b32.xlu0 %v808, 1
        %v822 = vpop.permute.xlu0 %821
        %823 = vrot.lane.b32.xlu0 %v809, 1
        %v824 = vpop.permute.xlu0 %823
        %825 = vrot.lane.b32.xlu0 %v810, 1
        %v826 = vpop.permute.xlu0 %825
        %827 = vrot.lane.b32.xlu0 %v811, 1
        %v828 = vpop.permute.xlu0 %827
        %829 = vrot.lane.b32.xlu0 %v812, 1
        %v830 = vpop.permute.xlu0 %829
        %v831 = vsel %vm415, %v820, %v822
        %v832 = vsel %vm415, %v822, %v824
        %v833 = vsel %vm415, %v826, %v828
        %v834 = vsel %vm415, %v828, %v830
        %839 = vst [vmem:[#allocation5 + $0x60] sm:$0xff] %v831
        %840 = vst [vmem:[#allocation5 + $0x68] sm:$0xff] %v832
        %841 = vst [vmem:[#allocation5 + $0x70] sm:$0xff] %v833
        %842 = vst [vmem:[#allocation5 + $0x78] sm:$0xff] %v834
        %v843 = vld [vmem:[#allocation4 + $0x8] sm:$0xff]
        %v844 = vld [vmem:[#allocation4 + $0x10] sm:$0xff]
        %v845 = vld [vmem:[#allocation4 + $0x28] sm:$0xff]
        %v846 = vld [vmem:[#allocation4 + $0x30] sm:$0xff]
        %847 = vst [vmem:[#allocation5 + $0x80] sm:$0xff] %v843
        %848 = vst [vmem:[#allocation5 + $0x88] sm:$0xff] %v844
        %849 = vst [vmem:[#allocation5 + $0x90] sm:$0xff] %v845
        %850 = vst [vmem:[#allocation5 + $0x98] sm:$0xff] %v846
        %v851 = vld [vmem:[#allocation4 + $0x8] sm:$0xff]
        %v852 = vld [vmem:[#allocation4 + $0x10] sm:$0xff]
        %v853 = vld [vmem:[#allocation4 + $0x18] sm:$0xff]
        %v854 = vld [vmem:[#allocation4 + $0x28] sm:$0xff]
        %v855 = vld [vmem:[#allocation4 + $0x30] sm:$0xff]
        %v856 = vld [vmem:[#allocation4 + $0x38] sm:$0xff]
        %857 = vrot.lane.b32.xlu0 %v364, 1
        %v858 = vpop.permute.xlu0 %857
        %859 = vrot.lane.b32.xlu0 %v368, 1
        %v860 = vpop.permute.xlu0 %859
        %v861 = vsel %vm415, %v858, %v860
        %v865 = vmul.f32 %v851, %v858
        %v866 = vmul.f32 %v852, %v861
        %v867 = vmul.f32 %v853, %v860
        %v868 = vmul.f32 %v854, %v858
        %v869 = vmul.f32 %v855, %v861
        %v870 = vmul.f32 %v856, %v860
        %877 = vrot.lane.b32.xlu0 %v865, 127
        %v878 = vpop.permute.xlu0 %877
        %879 = vrot.lane.b32.xlu0 %v866, 127
        %v880 = vpop.permute.xlu0 %879
        %881 = vrot.lane.b32.xlu0 %v867, 127
        %v882 = vpop.permute.xlu0 %881
        %883 = vrot.lane.b32.xlu0 %v868, 127
        %v884 = vpop.permute.xlu0 %883
        %885 = vrot.lane.b32.xlu0 %v869, 127
        %v886 = vpop.permute.xlu0 %885
        %887 = vrot.lane.b32.xlu0 %v870, 127
        %v888 = vpop.permute.xlu0 %887
        %v889 = vsel %vm400, %v878, %v880
        %v890 = vsel %vm400, %v880, %v882
        %v891 = vsel %vm400, %v884, %v886
        %v892 = vsel %vm400, %v886, %v888
        %897 = vst [vmem:[#allocation5 + $0xa0] sm:$0xff] %v889
        %898 = vst [vmem:[#allocation5 + $0xa8] sm:$0xff] %v890
        %899 = vst [vmem:[#allocation5 + $0xb0] sm:$0xff] %v891
        %900 = vst [vmem:[#allocation5 + $0xb8] sm:$0xff] %v892
        %v901 = vld [vmem:[#allocation4 + $0x8] sm:$0xff]
        %v902 = vld [vmem:[#allocation4 + $0x10] sm:$0xff]
        %v903 = vld [vmem:[#allocation4 + $0x18] sm:$0xff]
        %v904 = vld [vmem:[#allocation4 + $0x28] sm:$0xff]
        %v905 = vld [vmem:[#allocation4 + $0x30] sm:$0xff]
        %v906 = vld [vmem:[#allocation4 + $0x38] sm:$0xff]
        %907 = vrot.lane.b32.xlu0 %v309, 15
        %v908 = vpop.permute.xlu0 %907
        %909 = vrot.lane.b32.xlu0 %v313, 15
        %v910 = vpop.permute.xlu0 %909
        %v911 = vsel %vm388, %v908, %v910
        %v915 = vmul.f32 %v901, %v908
        %v916 = vmul.f32 %v902, %v911
        %v917 = vmul.f32 %v903, %v910
        %v918 = vmul.f32 %v904, %v908
        %v919 = vmul.f32 %v905, %v911
        %v920 = vmul.f32 %v906, %v910
        %927 = vrot.lane.b32.xlu0 %v915, 113
        %v928 = vpop.permute.xlu0 %927
        %929 = vrot.lane.b32.xlu0 %v916, 113
        %v930 = vpop.permute.xlu0 %929
        %931 = vrot.lane.b32.xlu0 %v917, 113
        %v932 = vpop.permute.xlu0 %931
        %933 = vrot.lane.b32.xlu0 %v918, 113
        %v934 = vpop.permute.xlu0 %933
        %935 = vrot.lane.b32.xlu0 %v919, 113
        %v936 = vpop.permute.xlu0 %935
        %937 = vrot.lane.b32.xlu0 %v920, 113
        %v938 = vpop.permute.xlu0 %937
        %v939 = vsel %vm373, %v928, %v930
        %v940 = vsel %vm373, %v930, %v932
        %v941 = vsel %vm373, %v934, %v936
        %v942 = vsel %vm373, %v936, %v938
        %947 = vst [vmem:[#allocation5 + $0xc0] sm:$0xff] %v939
        %948 = vst [vmem:[#allocation5 + $0xc8] sm:$0xff] %v940
        %949 = vst [vmem:[#allocation5 + $0xd0] sm:$0xff] %v941
        %950 = vst [vmem:[#allocation5 + $0xd8] sm:$0xff] %v942
        %v951 = vld [vmem:[#allocation4 + $0x8] sm:$0xff]
        %v952 = vld [vmem:[#allocation4 + $0x10] sm:$0xff]
        %v953 = vld [vmem:[#allocation4 + $0x18] sm:$0xff]
        %v954 = vld [vmem:[#allocation4 + $0x28] sm:$0xff]
        %v955 = vld [vmem:[#allocation4 + $0x30] sm:$0xff]
        %v956 = vld [vmem:[#allocation4 + $0x38] sm:$0xff]
        %963 = vrot.lane.b32.xlu0 %v951, 112
        %v964 = vpop.permute.xlu0 %963
        %965 = vrot.lane.b32.xlu0 %v952, 112
        %v966 = vpop.permute.xlu0 %965
        %967 = vrot.lane.b32.xlu0 %v953, 112
        %v968 = vpop.permute.xlu0 %967
        %969 = vrot.lane.b32.xlu0 %v954, 112
        %v970 = vpop.permute.xlu0 %969
        %971 = vrot.lane.b32.xlu0 %v955, 112
        %v972 = vpop.permute.xlu0 %971
        %973 = vrot.lane.b32.xlu0 %v956, 112
        %v974 = vpop.permute.xlu0 %973
        %v975 = vsel %vm489, %v964, %v966
        %v976 = vsel %vm489, %v966, %v968
        %v977 = vsel %vm489, %v970, %v972
        %v978 = vsel %vm489, %v972, %v974
        %983 = vst [vmem:[#allocation5 + $0xe0] sm:$0xff] %v975
        %984 = vst [vmem:[#allocation5 + $0xe8] sm:$0xff] %v976
        %985 = vst [vmem:[#allocation5 + $0xf0] sm:$0xff] %v977
        %986 = vst [vmem:[#allocation5 + $0xf8] sm:$0xff] %v978
        %v987 = vld [vmem:[#allocation4 + $0x8] sm:$0xff]
        %v988 = vld [vmem:[#allocation4 + $0x10] sm:$0xff]
        %v989 = vld [vmem:[#allocation4 + $0x18] sm:$0xff]
        %v990 = vld [vmem:[#allocation4 + $0x28] sm:$0xff]
        %v991 = vld [vmem:[#allocation4 + $0x30] sm:$0xff]
        %v992 = vld [vmem:[#allocation4 + $0x38] sm:$0xff]
        %993 = vrot.lane.b32.xlu0 %v364, 17
        %v994 = vpop.permute.xlu0 %993
        %995 = vrot.lane.b32.xlu0 %v368, 17
        %v996 = vpop.permute.xlu0 %995
        %v997 = vsel %vm333, %v994, %v996
        %v1001 = vmul.f32 %v987, %v994
        %v1002 = vmul.f32 %v988, %v997
        %v1003 = vmul.f32 %v989, %v996
        %v1004 = vmul.f32 %v990, %v994
        %v1005 = vmul.f32 %v991, %v997
        %v1006 = vmul.f32 %v992, %v996
        %1013 = vrot.lane.b32.xlu0 %v1001, 111
        %v1014 = vpop.permute.xlu0 %1013
        %1015 = vrot.lane.b32.xlu0 %v1002, 111
        %v1016 = vpop.permute.xlu0 %1015
        %1017 = vrot.lane.b32.xlu0 %v1003, 111
        %v1018 = vpop.permute.xlu0 %1017
        %1019 = vrot.lane.b32.xlu0 %v1004, 111
        %v1020 = vpop.permute.xlu0 %1019
        %1021 = vrot.lane.b32.xlu0 %v1005, 111
        %v1022 = vpop.permute.xlu0 %1021
        %1023 = vrot.lane.b32.xlu0 %v1006, 111
        %v1024 = vpop.permute.xlu0 %1023
        %v1025 = vsel %vm318, %v1014, %v1016
        %v1026 = vsel %vm318, %v1016, %v1018
        %v1027 = vsel %vm318, %v1020, %v1022
        %v1028 = vsel %vm318, %v1022, %v1024
        %1033 = vst [vmem:[#allocation5 + $0x100] sm:$0xff] %v1025
        %1034 = vst [vmem:[#allocation5 + $0x108] sm:$0xff] %v1026
        %1035 = vst [vmem:[#allocation5 + $0x110] sm:$0xff] %v1027
        %1036 = vst [vmem:[#allocation5 + $0x118] sm:$0xff] %v1028
        %v1037 = vld [vmem:[#allocation9] sm:$0xff]
        %v1038 = vld [vmem:[#allocation9 + $0x8] sm:$0xff]
        %v1039 = vld [vmem:[#allocation5] sm:$0xff]
        %v1040 = vld [vmem:[#allocation5 + $0x8] sm:$0xff]
        %v1041 = vld [vmem:[#allocation5 + $0x10] sm:$0xff]
        %v1042 = vld [vmem:[#allocation5 + $0x18] sm:$0xff]
        %v1043 = vld [vmem:[#allocation5 + $0x20] sm:$0xff]
        %v1044 = vld [vmem:[#allocation5 + $0x28] sm:$0xff]
        %v1045 = vld [vmem:[#allocation5 + $0x30] sm:$0xff]
        %v1046 = vld [vmem:[#allocation5 + $0x38] sm:$0xff]
        %v1047 = vld [vmem:[#allocation5 + $0x40] sm:$0xff]
        %v1048 = vld [vmem:[#allocation5 + $0x48] sm:$0xff]
        %v1049 = vld [vmem:[#allocation5 + $0x50] sm:$0xff]
        %v1050 = vld [vmem:[#allocation5 + $0x58] sm:$0xff]
        %v1051 = vld [vmem:[#allocation5 + $0x60] sm:$0xff]
        %v1052 = vld [vmem:[#allocation5 + $0x68] sm:$0xff]
        %v1053 = vld [vmem:[#allocation5 + $0x70] sm:$0xff]
        %v1054 = vld [vmem:[#allocation5 + $0x78] sm:$0xff]
        %v1055 = vld [vmem:[#allocation5 + $0x80] sm:$0xff]
        %v1056 = vld [vmem:[#allocation5 + $0x88] sm:$0xff]
        %v1057 = vld [vmem:[#allocation5 + $0x90] sm:$0xff]
        %v1058 = vld [vmem:[#allocation5 + $0x98] sm:$0xff]
        %v1059 = vld [vmem:[#allocation5 + $0xa0] sm:$0xff]
        %v1060 = vld [vmem:[#allocation5 + $0xa8] sm:$0xff]
        %v1061 = vld [vmem:[#allocation5 + $0xb0] sm:$0xff]
        %v1062 = vld [vmem:[#allocation5 + $0xb8] sm:$0xff]
        %v1063 = vld [vmem:[#allocation5 + $0xc0] sm:$0xff]
        %v1064 = vld [vmem:[#allocation5 + $0xc8] sm:$0xff]
        %v1065 = vld [vmem:[#allocation5 + $0xd0] sm:$0xff]
        %v1066 = vld [vmem:[#allocation5 + $0xd8] sm:$0xff]
        %v1067 = vld [vmem:[#allocation5 + $0xe0] sm:$0xff]
        %v1068 = vld [vmem:[#allocation5 + $0xe8] sm:$0xff]
        %v1069 = vld [vmem:[#allocation5 + $0xf0] sm:$0xff]
        %v1070 = vld [vmem:[#allocation5 + $0xf8] sm:$0xff]
        %v1071 = vld [vmem:[#allocation5 + $0x100] sm:$0xff]
        %v1072 = vld [vmem:[#allocation5 + $0x108] sm:$0xff]
        %v1073 = vld [vmem:[#allocation5 + $0x110] sm:$0xff]
        %v1074 = vld [vmem:[#allocation5 + $0x118] sm:$0xff]
        %v1075 = vld [vmem:[%s4] sm:$0xff]
        %1077 = vset.pattern.permute.xlu0 0
        %1078 = vperm.xlu0 %1077, %v1075
        %v1079 = vpop.permute.xlu0 %1078
        %v1082 = vsel %vm351, %v1038, 0
        %1084 = vmatprep.subr.mxu0 %v1070
        %1085 = vmatpush1.msra.mxu0 %v1069
        %1086 = vmatprep.subr.mxu0 %v1068
        %1087 = vmatpush1.msra.mxu0 %v1067
        %1088 = vmatprep.subr.mxu0 %v1066
        %1089 = vmatpush1.msra.mxu0 %v1065
        %1090 = vmatprep.subr.mxu0 %v1064
        %1091 = vmatpush1.msra.mxu0 %v1063
        %1092 = vmatprep.subr.mxu0 %v1062
        %1093 = vmatpush1.msra.mxu0 %v1061
        %1094 = vmatprep.subr.mxu0 %v1060
        %1095 = vmatpush1.msra.mxu0 %v1059
        %1096 = vmatprep.subr.mxu0 %v1058
        %1097 = vmatpush1.msra.mxu0 %v1057
        %1098 = vmatprep.subr.mxu0 %v1056
        %1099 = vmatpush1.msra.mxu0 %v1055
        %1100 = vmatprep.subr.mxu0 %v1054
        %1101 = vmatpush1.msra.mxu0 %v1053
        %1102 = vmatprep.subr.mxu0 %v1052
        %1103 = vmatpush1.msra.mxu0 %v1051
        %1104 = vmatprep.subr.mxu0 %v1050
        %1105 = vmatpush1.msra.mxu0 %v1049
        %1106 = vmatprep.subr.mxu0 %v1048
        %1107 = vmatpush1.msra.mxu0 %v1047
        %1108 = vmatprep.subr.mxu0 %v1046
        %1109 = vmatpush1.msra.mxu0 %v1045
        %1110 = vmatprep.subr.mxu0 %v1044
        %1111 = vmatpush1.msra.mxu0 %v1043
        %1112 = vmatprep.subr.mxu0 %v1042
        %1113 = vmatpush1.msra.mxu0 %v1041
        %1114 = vmatprep.subr.mxu0 %v1040
        %1115 = vmatpush1.msra.mxu0 %v1039
        %1116 = vmatprep.subr.mxu0 0.0
        %1117 = vmatpush2.msra.mxu0 0.0
        %1118 = vmatprep.subr.mxu0 0.0
        %1119 = vmatpush2.msra.mxu0 0.0
        %1120 = vmatprep.subr.mxu0 0.0
        %1121 = vmatpush2.msra.mxu0 0.0
        %1122 = vmatprep.subr.mxu0 0.0
        %1123 = vmatpush2.msra.mxu0 0.0
        %1124 = vmatprep.subr.mxu0 0.0
        %1125 = vmatpush2.msra.mxu0 0.0
        %1126 = vmatprep.subr.mxu0 0.0
        %1127 = vmatpush2.msra.mxu0 0.0
        %1128 = vmatprep.subr.mxu0 0.0
        %1129 = vmatpush2.msra.mxu0 0.0
        %1130 = vmatprep.subr.mxu0 0.0
        %1131 = vmatpush2.msra.mxu0 0.0
        %1132 = vmatprep.subr.mxu0 0.0
        %1133 = vmatpush2.msra.mxu0 0.0
        %1134 = vmatprep.subr.mxu0 0.0
        %1135 = vmatpush2.msra.mxu0 0.0
        %1136 = vmatprep.subr.mxu0 0.0
        %1137 = vmatpush2.msra.mxu0 0.0
        %1138 = vmatprep.subr.mxu0 0.0
        %1139 = vmatpush2.msra.mxu0 0.0
        %1140 = vmatprep.subr.mxu0 0.0
        %1141 = vmatpush2.msra.mxu0 0.0
        %1142 = vmatprep.subr.mxu0 0.0
        %1143 = vmatpush2.msra.mxu0 0.0
        %1144 = vmatprep.subr.mxu0 %v1074
        %1145 = vmatpush2.msra.mxu0 %v1073
        %1146 = vmatprep.subr.mxu0 %v1072
        %1147 = vmatpush2.msra.mxu0 %v1071
        %1148 = vmatprep.mubr.f32.mxu0 %v1082
        %1149 = vmatmul.mubr.f32.gmra.mxu0 %v1037
        %v1150 = vpop.f32.mrf.mxu0
        %v1151 = vadd.f32 %v1079, %v1150
        %v1152 = vpop.f32.mrf.mxu0
        %v1153 = vadd.f32 %v1079, %v1152
        %1154 = vdwg.mxu0
        %v1155 = vmul.f32 %v1151, 0.01
        %v1156 = vmul.f32 %v1153, 0.01
        %v1157 = vmax.f32 %v1151, %v1155
        %v1158 = vmax.f32 %v1153, %v1156
        %1159 = vst [vmem:[%s272] sm:$0xff] %v1157
        %1160 = vst [vmem:[%s272 + $0x8] sm:$0xff] %v1158
        %s1161 = sand.u32 %s161, 1
        %s1162 = scalar_lea.sflag [#allocation8], %s1161
        %s1163 = sand.u32 %s161, 1
        %s1164 = smul.addr %s1163, 16
        %s1165 = scalar_lea.vmem [#allocation11], %s1164
        // Predicated region
        $region53: #{tpu_custom_call.1} parent=43 // pred_check
          %p1166 = pneg %p171
        $region54: #{tpu_custom_call.1} parent=43 // pred_check_branch
          %1168 = sbr.rel (%p1166) target = $region56
        $region55: #{tpu_custom_call.1} parent=43 // pred_region
          %s1170 = ssub.s32 256, 256
          %1171 = vsyncadd %s1162, %s1170
          %s1172 = smul.addr %s22, 2
          %s1173 = smul.addr %s1172, 128
          %s1174 = scalar_lea.hbm %s6, %s1173
          %s1176 = sshll.u32 %s1165, 4
          %s1177 = int_to_ptr.vmem [resolvable:$true] %s1176
          %1179 = dma.vmem_to_hbm [thread:$0]  %s1177, 256, %s1174, %s1162
        $region56: #{tpu_custom_call.1} parent=43 // pred_fallthru
          _
      $region44: #{tpu_custom_call.1} parent=5 // pred_fallthru
        _
      %p1180 = scmp.le.s32.totalorder 2, %s17
      // Predicated region
      $region57: #{tpu_custom_call.1} parent=5 // pred_check
        %p1181 = pneg %p1180
      $region58: #{tpu_custom_call.1} parent=5 // pred_check_branch
        %1183 = sbr.rel (%p1181) target = $region60
      $region59: #{tpu_custom_call.1} parent=5 // pred_region
        %s1184 = ssub.s32 %s17, 2
        // Predicated region
        $region61: #{tpu_custom_call.1} parent=59 // pred_check
          %p1185 = pneg %p177
        $region62: #{tpu_custom_call.1} parent=59 // pred_check_branch
          %1187 = sbr.rel (%p1185) target = $region64
        $region63: #{tpu_custom_call.1} parent=59 // pred_region
          %s1188 = sand.u32 %s162, 1
          %s1189 = scalar_lea.sflag [#allocation8], %s1188
          %s1190 = sand.u32 %s162, 1
          %s1191 = smul.addr %s1190, 16
          %s1192 = scalar_lea.vmem [#allocation11], %s1191
          %1193 = dma.done %s1189, 256
        $region64: #{tpu_custom_call.1} parent=59 // pred_fallthru
          _
      $region60: #{tpu_custom_call.1} parent=5 // pred_fallthru
        _
    $region6: #{tpu_custom_call.1} parent=1 // loop_footer
      %s21 = sadd.s32 1, %s17
    $region7: #{tpu_custom_call.1} parent=1 // loop_footer_branch
      %16 = sbr.rel target = $region3
    $region8: #{tpu_custom_call.1} parent=1 // loop_exit
      _
    %1194 = vsyncpa [#allocation7], 1
    %s1195 = scalar_lea.sflag [#allocation7], 1
    %1196 = vsyncpa %s1195, 1
    %1197 = vsyncpa [#allocation10], 1
    %1198 = vsyncpa [#allocation8], 1
    %s1199 = scalar_lea.sflag [#allocation8], 1
    %1200 = vsyncpa %s1199, 1

</llo_original>
